<compile_context>
chip_gen: v7x
topology: tpu7x:2x2x1
jax: 0.10.0
libtpu: 0.0.40
codegen_flags: <defaults>
</compile_context>

<pallas_src>
import functools

import jax
import jax.numpy as jnp
from jax.experimental import pallas as pl
from jax.experimental.pallas import tpu as pltpu

LANE = 128
SUBLANE = 8


def _round_up(x, m):
    return ((x + m - 1) // m) * m


def _pick_row_block(mp):
    for tm in (512, 384, 256, 128):
        if mp % tm == 0:
            return tm
    return mp


# -----------------------------------------------------------------------------
# Kernel 1: GCN layer-1 propagation + layer-2 feature transform
#   xc1[rows] = relu(A[rows,:] @ (x @ W1) + b1);  xw2[rows] = xc1 @ W2  (bf16)
# -----------------------------------------------------------------------------
def gcn1_kernel(a_ref, x_ref, w1_ref, b1_ref, w2_ref, xw2_ref):
    a = a_ref[...]                                    # (tm, Mp) bf16
    x = x_ref[...]                                    # (Mp, T)  f32
    if x_ref.shape[1] == 1:
        # K=1 contraction -> pure VPU broadcast multiply; keeps the MXU free.
        xw1 = x * w1_ref[...]                         # (Mp,1)*(1,HP) -> (Mp,HP)
    else:
        xw1 = jnp.dot(x, w1_ref[...], preferred_element_type=jnp.float32)
    xc1 = jnp.dot(a, xw1.astype(jnp.bfloat16),
                  preferred_element_type=jnp.float32) + b1_ref[...]
    xc1 = jnp.maximum(xc1, 0.0)
    xw2_ref[...] = jnp.dot(xc1.astype(jnp.bfloat16), w2_ref[...],
                           preferred_element_type=jnp.float32).astype(jnp.bfloat16)


# -----------------------------------------------------------------------------
# Kernel 2: GCN layer-2 propagation + GRUCell (torch semantics) + fc
# -----------------------------------------------------------------------------
def gcn2_gru_fc_kernel(a_ref, xw2_ref, b2_ref, h_ref,
                       wgx_ref, bgx_ref, wgh_ref, bgh_ref,
                       fcw_ref, fcb_ref,
                       out_ref, hnew_ref, *, m_valid):
    tm, HP = h_ref.shape
    a = a_ref[...]                                    # (tm, Mp) bf16
    h = h_ref[...]                                    # (tm, HP) f32

    xc2 = jnp.dot(a, xw2_ref[...], preferred_element_type=jnp.float32) + b2_ref[...]
    xc2 = jnp.maximum(xc2, 0.0)

    # Split gate matmuls (bf16 operands, f32 accumulation); columns per block:
    #   [0:HP]=r, [HP:2HP]=z, [2HP:3HP]=n   (128-lane aligned -> whole-vreg slices)
    gx = jnp.dot(xc2.astype(jnp.bfloat16), wgx_ref[...],
                 preferred_element_type=jnp.float32) + bgx_ref[...]
    gh = jnp.dot(h.astype(jnp.bfloat16), wgh_ref[...],
                 preferred_element_type=jnp.float32) + bgh_ref[...]

    r = jax.nn.sigmoid(gx[:, 0:HP] + gh[:, 0:HP])
    z = jax.nn.sigmoid(gx[:, HP:2 * HP] + gh[:, HP:2 * HP])
    n = jnp.tanh(gx[:, 2 * HP:3 * HP] + r * gh[:, 2 * HP:3 * HP])
    h_new = (1.0 - z) * n + z * h

    # Mask padded rows so the (aliased) padded hidden state stays clean.
    row = pl.program_id(0) * tm + jax.lax.broadcasted_iota(jnp.int32, (tm, 1), 0)
    valid = row < m_valid
    h_new = jnp.where(valid, h_new, 0.0)

    out = jnp.dot(h_new.astype(jnp.bfloat16), fcw_ref[...],
                  preferred_element_type=jnp.float32) + fcb_ref[...]
    out_ref[...] = jnp.where(valid, out, 0.0)
    hnew_ref[...] = h_new


# -----------------------------------------------------------------------------
# Parameter layout plumbing: pad to lane-aligned widths, pre-cast weights bf16
# -----------------------------------------------------------------------------
def prepare_params(params, num_time_steps, hidden_dim, prediction_steps):
    T, H, P = num_time_steps, hidden_dim, prediction_steps
    HP = _round_up(H, LANE)
    PP = _round_up(P, LANE)

    def pad(m, rows, cols, dtype=jnp.float32):
        out = jnp.zeros((rows, cols), jnp.float32)
        out = out.at[:m.shape[0], :m.shape[1]].set(m.astype(jnp.float32))
        return out.astype(dtype)

    w1 = pad(params["w1"], T, HP)                     # f32 (VPU broadcast path)
    b1 = pad(params["b1"], 1, HP)
    w2 = pad(params["w2"], HP, HP, jnp.bfloat16)
    b2 = pad(params["b2"], 1, HP)

    wih_t, whh_t = params["wih_t"], params["whh_t"]   # (H, 3H) transposed torch
    bih, bhh = params["bih"], params["bhh"]           # (1, 3H)

    def gate_blocks(w):
        out = jnp.zeros((HP, 3 * HP), jnp.float32)
        for g in range(3):
            out = out.at[:H, g * HP:g * HP + H].set(
                w[:, g * H:(g + 1) * H].astype(jnp.float32))
        return out.astype(jnp.bfloat16)

    def gate_bias(b):
        out = jnp.zeros((1, 3 * HP), jnp.float32)
        for g in range(3):
            out = out.at[:, g * HP:g * HP + H].set(
                b[:, g * H:(g + 1) * H].astype(jnp.float32))
        return out

    wgx, bgx = gate_blocks(wih_t), gate_bias(bih)
    wgh, bgh = gate_blocks(whh_t), gate_bias(bhh)

    fcw = pad(params["fcw_t"], HP, PP, jnp.bfloat16)
    fcb = pad(params["fc_b"], 1, PP)

    return dict(w1=w1, b1=b1, w2=w2, b2=b2, wgx=wgx, bgx=bgx,
                wgh=wgh, bgh=bgh, fcw=fcw, fcb=fcb)


def _vmem_limit(byte_terms):
    est = int(sum(byte_terms)) + (4 << 20)            # headroom
    return int(min(48 << 20, max(32 << 20, est)))     # <=48 MiB (v7x TC = 64 MiB)


# -----------------------------------------------------------------------------
# Forward wrapper
# -----------------------------------------------------------------------------
@functools.partial(jax.jit,
                   static_argnames=("num_samples", "num_nodes", "prediction_steps"))
def graphrnn_forward(kparams, x, h, a_hat_bf16, *, num_samples, num_nodes,
                     prediction_steps):
    """x: (num_samples, num_nodes, T), h: (num_samples, num_nodes, H),
    a_hat_bf16: (Mp, Mp) bf16 normalized adjacency, zero-padded to mult of 128."""
    T = x.shape[-1]
    H = h.shape[-1]
    P = prediction_steps
    M = num_samples * num_nodes
    HP = kparams["b1"].shape[-1]
    PP = kparams["fcb"].shape[-1]
    Mp = a_hat_bf16.shape[0]
    tm = _pick_row_block(Mp)
    nr = Mp // tm

    # Zero-pad rows to Mp and hidden to HP (padded lanes/rows provably stay 0).
    x2 = jnp.zeros((Mp, T), jnp.float32).at[:M].set(
        x.reshape(M, T).astype(jnp.float32))
    h2 = jnp.zeros((Mp, HP), jnp.float32).at[:M, :H].set(
        h.reshape(M, H).astype(jnp.float32))

    def const(shape):
        return pl.BlockSpec(shape, lambda i: (0,) * len(shape))

    # ---- pass 1: layer-1 propagation + layer-2 feature transform -------------
    k1_vmem = _vmem_limit([
        2 * tm * Mp * 2,                 # A blocks (double buffered)
        2 * Mp * T * 4, T * HP * 4, HP * 4, HP * HP * 2,
        2 * tm * HP * 2,                 # output blocks
        Mp * HP * 2 + 2 * tm * HP * 4])  # xw1 + f32 temporaries
    xw2 = pl.pallas_call(
        gcn1_kernel,
        grid=(nr,),
        in_specs=[
            pl.BlockSpec((tm, Mp), lambda i: (i, 0)),
            const((Mp, T)),
            const((T, HP)),
            const((1, HP)),
            const((HP, HP)),
        ],
        out_specs=pl.BlockSpec((tm, HP), lambda i: (i, 0)),
        out_shape=jax.ShapeDtypeStruct((Mp, HP), jnp.bfloat16),
        compiler_params=pltpu.CompilerParams(
            dimension_semantics=("parallel",), vmem_limit_bytes=k1_vmem),
        cost_estimate=pl.CostEstimate(
            flops=2 * Mp * Mp * HP + 2 * Mp * HP * HP + 2 * Mp * T * HP,
            transcendentals=0,
            bytes_accessed=(Mp * Mp * 2 + Mp * T * 4 + HP * HP * 2
                            + Mp * HP * 2)),
    )(a_hat_bf16, x2, kparams["w1"], kparams["b1"], kparams["w2"])

    # ---- pass 2: layer-2 propagation + GRU + fc -------------------------------
    k2_vmem = _vmem_limit([
        2 * tm * Mp * 2,                 # A blocks (double buffered)
        Mp * HP * 2, HP * 4,
        2 * tm * HP * 4,                 # h blocks
        2 * HP * 3 * HP * 2, 2 * 3 * HP * 4, HP * PP * 2, PP * 4,
        2 * tm * PP * 4, 2 * tm * HP * 4,      # output blocks
        2 * tm * 3 * HP * 4 + 4 * tm * HP * 4])  # gx/gh + gate temporaries
    out, h_new = pl.pallas_call(
        functools.partial(gcn2_gru_fc_kernel, m_valid=M),
        grid=(nr,),
        in_specs=[
            pl.BlockSpec((tm, Mp), lambda i: (i, 0)),
            const((Mp, HP)),
            const((1, HP)),
            pl.BlockSpec((tm, HP), lambda i: (i, 0)),
            const((HP, 3 * HP)),
            const((1, 3 * HP)),
            const((HP, 3 * HP)),
            const((1, 3 * HP)),
            const((HP, PP)),
            const((1, PP)),
        ],
        out_specs=(pl.BlockSpec((tm, PP), lambda i: (i, 0)),
                   pl.BlockSpec((tm, HP), lambda i: (i, 0))),
        out_shape=(jax.ShapeDtypeStruct((Mp, PP), jnp.float32),
                   jax.ShapeDtypeStruct((Mp, HP), jnp.float32)),
        input_output_aliases={3: 1},     # reuse the hidden-state buffer for h_new
        compiler_params=pltpu.CompilerParams(
            dimension_semantics=("parallel",), vmem_limit_bytes=k2_vmem),
        cost_estimate=pl.CostEstimate(
            flops=(2 * Mp * Mp * HP + 4 * Mp * HP * 3 * HP + 2 * Mp * HP * PP),
            transcendentals=3 * Mp * HP,
            bytes_accessed=(Mp * Mp * 2 + Mp * HP * 2 + Mp * HP * 4
                            + 2 * HP * 3 * HP * 2 + HP * PP * 2
                            + Mp * PP * 4 + Mp * HP * 4)),
    )(a_hat_bf16, xw2, kparams["b2"], h2, kparams["wgx"], kparams["bgx"],
      kparams["wgh"], kparams["bgh"], kparams["fcw"], kparams["fcb"])

    return (out[:M, :P].reshape(num_samples, num_nodes, P),
            h_new[:M, :H].reshape(num_samples, num_nodes, H))


# -----------------------------------------------------------------------------
# Glue: dense normalized adjacency (PyG GCNConv gcn_norm semantics)
# -----------------------------------------------------------------------------
def build_gcn_adjacency(edge_index, edge_weight, num_total_nodes):
    """A_hat[dst, src] = d[dst]^-1/2 * w * d[src]^-1/2 ; self loops weight 1."""
    src, dst = edge_index[0], edge_index[1]
    a = jnp.zeros((num_total_nodes, num_total_nodes), jnp.float32)
    a = a.at[dst, src].add(edge_weight.astype(jnp.float32))
    a = a + jnp.eye(num_total_nodes, dtype=jnp.float32)   # add_self_loops
    deg = a.sum(axis=1)
    dinv = jnp.where(deg > 0, 1.0 / jnp.sqrt(deg), 0.0)
    return dinv[:, None] * a * dinv[None, :]


# -----------------------------------------------------------------------------
# Pure-JAX f32 reference (unpadded, unfused) for a sanity check of the kernel
# -----------------------------------------------------------------------------
def reference_forward(params, x, h, a_hat, num_samples, num_nodes):
    T = x.shape[-1]
    H = h.shape[-1]
    M = num_samples * num_nodes
    xc = x.reshape(M, T)
    hh = h.reshape(M, H)
    xc = jax.nn.relu(a_hat @ (xc @ params["w1"]) + params["b1"])
    xc = jax.nn.relu(a_hat @ (xc @ params["w2"]) + params["b2"])
    gi = xc @ params["wih_t"] + params["bih"]
    gh = hh @ params["whh_t"] + params["bhh"]
    r = jax.nn.sigmoid(gi[:, 0:H] + gh[:, 0:H])
    z = jax.nn.sigmoid(gi[:, H:2 * H] + gh[:, H:2 * H])
    n = jnp.tanh(gi[:, 2 * H:3 * H] + r * gh[:, 2 * H:3 * H])
    h_new = (1.0 - z) * n + z * hh
    out = h_new @ params["fcw_t"] + params["fc_b"]
    P = out.shape[-1]
    return (out.reshape(num_samples, num_nodes, P),
            h_new.reshape(num_samples, num_nodes, H))


# -----------------------------------------------------------------------------
if __name__ == "__main__":
    # Small shapes consistent with the module's forward.
    num_samples = 2          # batch of graph snapshots
    num_nodes = 16           # sensors
    num_time_steps = 1       # features per node (num_features_per_node * T)
    hidden_dim = 64
    prediction_steps = 5     # n
    M = num_samples * num_nodes
    Mp = _round_up(max(M, SUBLANE), LANE)

    key = jax.random.PRNGKey(0)
    keys = jax.random.split(key, 12)

    # Deterministic synthetic parameters (GCNConv weights, GRUCell, Linear),
    # stored in torch-equivalent (transposed) layout.
    s = 0.1
    params = {
        "w1": s * jax.random.normal(keys[0], (num_time_steps, hidden_dim), jnp.float32),
        "b1": s * jax.random.normal(keys[1], (1, hidden_dim), jnp.float32),
        "w2": s * jax.random.normal(keys[2], (hidden_dim, hidden_dim), jnp.float32),
        "b2": s * jax.random.normal(keys[3], (1, hidden_dim), jnp.float32),
        "wih_t": s * jax.random.normal(keys[4], (hidden_dim, 3 * hidden_dim), jnp.float32),
        "whh_t": s * jax.random.normal(keys[5], (hidden_dim, 3 * hidden_dim), jnp.float32),
        "bih": s * jax.random.normal(keys[6], (1, 3 * hidden_dim), jnp.float32),
        "bhh": s * jax.random.normal(keys[7], (1, 3 * hidden_dim), jnp.float32),
        "fcw_t": s * jax.random.normal(keys[8], (hidden_dim, prediction_steps), jnp.float32),
        "fc_b": s * jax.random.normal(keys[9], (1, prediction_steps), jnp.float32),
    }
    kparams = prepare_params(params, num_time_steps, hidden_dim, prediction_steps)

    # Synthetic graph: ring over the `num_nodes` sensors, positive edge weights.
    src = jnp.arange(num_nodes, dtype=jnp.int32)
    dst = (src + 1) % num_nodes
    edge_index = jnp.stack([jnp.concatenate([src, dst]),
                            jnp.concatenate([dst, src])], axis=0)
    edge_weight = jnp.abs(
        jax.random.normal(keys[10], (edge_index.shape[1],), jnp.float32)) + 0.1

    a_hat = build_gcn_adjacency(edge_index, edge_weight, M)
    a_hat_pad = jnp.zeros((Mp, Mp), jnp.float32).at[:M, :M].set(a_hat)
    # Cast once here (reused every step) instead of per-call in the hot path.
    a_hat_bf16 = a_hat_pad.astype(jnp.bfloat16)

    # Inputs: x (num_samples, num_nodes, T), hidden state h (num_samples, num_nodes, H)
    x = jax.random.normal(keys[11], (num_samples, num_nodes, num_time_steps), jnp.float32)
    h0 = jnp.zeros((num_samples, num_nodes, hidden_dim), jnp.float32)

    out, h_new = graphrnn_forward(kparams, x, h0, a_hat_bf16,
                                  num_samples=num_samples, num_nodes=num_nodes,
                                  prediction_steps=prediction_steps)
    out, h_new = jax.block_until_ready((out, h_new))

    # Sanity check against the pure-f32 reference (kernel uses bf16 adjacency,
    # bf16 GCN/GRU/fc matmul operands with f32 accumulation -> modest tolerance).
    out_ref, h_ref = reference_forward(params, x, h0, a_hat, num_samples, num_nodes)
    assert out.shape == (num_samples, num_nodes, prediction_steps)
    assert h_new.shape == (num_samples, num_nodes, hidden_dim)
    assert jnp.allclose(out, out_ref, atol=2e-2), "out mismatch vs reference"
    assert jnp.allclose(h_new, h_ref, atol=2e-2), "h mismatch vs reference"

    print("KERNEL_OK")
</pallas_src>

<mosaic_0001>
module attributes {stable_mosaic.version = 11 : i64} {
  func.func @gcn1_kernel(%arg0: i32, %arg1: memref<128x128xbf16, #tpu.memory_space<vmem>>, %arg2: memref<128x1xf32, #tpu.memory_space<vmem>>, %arg3: memref<1x128xf32, #tpu.memory_space<vmem>>, %arg4: memref<1x128xf32, #tpu.memory_space<vmem>>, %arg5: memref<128x128xbf16, #tpu.memory_space<vmem>>, %arg6: memref<128x128xbf16, #tpu.memory_space<vmem>>) attributes {dimension_semantics = [#tpu.dimension_semantics<parallel>], iteration_bounds = array<i64: 1>, scalar_prefetch = 0 : i64, scratch_operands = 0 : i64, tpu.core_type = #tpu.core_type<tc>, window_params = [{transform_indices = @transform_0, window_bounds = array<i64: 128, 128>}, {pipeline_mode = #tpu.pipeline_mode<synchronous>, transform_indices = @transform_1, window_bounds = array<i64: 128, 1>}, {pipeline_mode = #tpu.pipeline_mode<synchronous>, transform_indices = @transform_2, window_bounds = array<i64: 1, 128>}, {pipeline_mode = #tpu.pipeline_mode<synchronous>, transform_indices = @transform_3, window_bounds = array<i64: 1, 128>}, {pipeline_mode = #tpu.pipeline_mode<synchronous>, transform_indices = @transform_4, window_bounds = array<i64: 128, 128>}, {transform_indices = @transform_5, window_bounds = array<i64: 128, 128>}]} {
    %c0 = arith.constant 0 : index
    %c0_0 = arith.constant 0 : index
    %0 = vector.load %arg1[%c0, %c0_0] : memref<128x128xbf16, #tpu.memory_space<vmem>>, vector<128x128xbf16>
    %c0_1 = arith.constant 0 : index
    %c0_2 = arith.constant 0 : index
    %1 = vector.load %arg2[%c0_1, %c0_2] : memref<128x1xf32, #tpu.memory_space<vmem>>, vector<128x1xf32>
    %c0_3 = arith.constant 0 : index
    %c0_4 = arith.constant 0 : index
    %2 = vector.load %arg3[%c0_3, %c0_4] : memref<1x128xf32, #tpu.memory_space<vmem>>, vector<1x128xf32>
    %3 = vector.broadcast %1 : vector<128x1xf32> to vector<128x128xf32>
    %4 = vector.broadcast %2 : vector<1x128xf32> to vector<128x128xf32>
    %5 = arith.mulf %3, %4 : vector<128x128xf32>
    %6 = arith.truncf %5 : vector<128x128xf32> to vector<128x128xbf16>
    %cst = arith.constant dense<0.000000e+00> : vector<128x128xf32>
    %7 = tpu.matmul %0, %6, %cst {dimension_numbers = #tpu.dot_dimension_numbers<[1], [0], [0], [1], [0, 0, 1, 1], [], []>} : vector<128x128xbf16>, vector<128x128xbf16>, vector<128x128xf32> -> vector<128x128xf32>
    %c0_5 = arith.constant 0 : index
    %c0_6 = arith.constant 0 : index
    %8 = vector.load %arg4[%c0_5, %c0_6] : memref<1x128xf32, #tpu.memory_space<vmem>>, vector<1x128xf32>
    %9 = vector.broadcast %8 : vector<1x128xf32> to vector<128x128xf32>
    %10 = arith.addf %7, %9 : vector<128x128xf32>
    %cst_7 = arith.constant 0.000000e+00 : f32
    %11 = vector.broadcast %cst_7 : f32 to vector<128x128xf32>
    %12 = arith.maximumf %10, %11 : vector<128x128xf32>
    %13 = arith.truncf %12 : vector<128x128xf32> to vector<128x128xbf16>
    %c0_8 = arith.constant 0 : index
    %c0_9 = arith.constant 0 : index
    %14 = vector.load %arg5[%c0_8, %c0_9] : memref<128x128xbf16, #tpu.memory_space<vmem>>, vector<128x128xbf16>
    %cst_10 = arith.constant dense<0.000000e+00> : vector<128x128xf32>
    %15 = tpu.matmul %13, %14, %cst_10 {dimension_numbers = #tpu.dot_dimension_numbers<[1], [0], [0], [1], [0, 0, 1, 1], [], []>} : vector<128x128xbf16>, vector<128x128xbf16>, vector<128x128xf32> -> vector<128x128xf32>
    %16 = arith.truncf %15 : vector<128x128xf32> to vector<128x128xbf16>
    %c0_11 = arith.constant 0 : index
    %c0_12 = arith.constant 0 : index
    %17 = vector.load %arg6[%c0_11, %c0_12] : memref<128x128xbf16, #tpu.memory_space<vmem>>, vector<128x128xbf16>
    tpu.vector_store %arg6[%c0_11, %c0_12], %16 {strides = array<i32>} : memref<128x128xbf16, #tpu.memory_space<vmem>>, vector<128x128xbf16>,
    return
  }
  func.func @transform_0(%arg0: i32) -> (i32, i32) {
    %c0_i32 = arith.constant 0 : i32
    %c0_i32_0 = arith.constant 0 : i32
    return %arg0, %c0_i32 : i32, i32
  }
  func.func @transform_1(%arg0: i32) -> (i32, i32) {
    %c0_i32 = arith.constant 0 : i32
    %c0_i32_0 = arith.constant 0 : i32
    %c0_i32_1 = arith.constant 0 : i32
    return %c0_i32, %c0_i32_0 : i32, i32
  }
  func.func @transform_2(%arg0: i32) -> (i32, i32) {
    %c0_i32 = arith.constant 0 : i32
    %c0_i32_0 = arith.constant 0 : i32
    %c0_i32_1 = arith.constant 0 : i32
    return %c0_i32, %c0_i32_0 : i32, i32
  }
  func.func @transform_3(%arg0: i32) -> (i32, i32) {
    %c0_i32 = arith.constant 0 : i32
    %c0_i32_0 = arith.constant 0 : i32
    %c0_i32_1 = arith.constant 0 : i32
    return %c0_i32, %c0_i32_0 : i32, i32
  }
  func.func @transform_4(%arg0: i32) -> (i32, i32) {
    %c0_i32 = arith.constant 0 : i32
    %c0_i32_0 = arith.constant 0 : i32
    %c0_i32_1 = arith.constant 0 : i32
    return %c0_i32, %c0_i32_0 : i32, i32
  }
  func.func @transform_5(%arg0: i32) -> (i32, i32) {
    %c0_i32 = arith.constant 0 : i32
    %c0_i32_0 = arith.constant 0 : i32
    return %arg0, %c0_i32 : i32, i32
  }
}

module attributes {stable_mosaic.version = 11 : i64} {
  func.func @gcn2_gru_fc_kernel(%arg0: i32, %arg1: memref<128x128xbf16, #tpu.memory_space<vmem>>, %arg2: memref<128x128xbf16, #tpu.memory_space<vmem>>, %arg3: memref<1x128xf32, #tpu.memory_space<vmem>>, %arg4: memref<128x128xf32, #tpu.memory_space<vmem>>, %arg5: memref<128x384xbf16, #tpu.memory_space<vmem>>, %arg6: memref<1x384xf32, #tpu.memory_space<vmem>>, %arg7: memref<128x384xbf16, #tpu.memory_space<vmem>>, %arg8: memref<1x384xf32, #tpu.memory_space<vmem>>, %arg9: memref<128x128xbf16, #tpu.memory_space<vmem>>, %arg10: memref<1x128xf32, #tpu.memory_space<vmem>>, %arg11: memref<128x128xf32, #tpu.memory_space<vmem>>, %arg12: memref<128x128xf32, #tpu.memory_space<vmem>>) attributes {dimension_semantics = [#tpu.dimension_semantics<parallel>], iteration_bounds = array<i64: 1>, scalar_prefetch = 0 : i64, scratch_operands = 0 : i64, tpu.core_type = #tpu.core_type<tc>, window_params = [{transform_indices = @transform_0, window_bounds = array<i64: 128, 128>}, {pipeline_mode = #tpu.pipeline_mode<synchronous>, transform_indices = @transform_1, window_bounds = array<i64: 128, 128>}, {pipeline_mode = #tpu.pipeline_mode<synchronous>, transform_indices = @transform_2, window_bounds = array<i64: 1, 128>}, {transform_indices = @transform_3, window_bounds = array<i64: 128, 128>}, {pipeline_mode = #tpu.pipeline_mode<synchronous>, transform_indices = @transform_4, window_bounds = array<i64: 128, 384>}, {pipeline_mode = #tpu.pipeline_mode<synchronous>, transform_indices = @transform_5, window_bounds = array<i64: 1, 384>}, {pipeline_mode = #tpu.pipeline_mode<synchronous>, transform_indices = @transform_6, window_bounds = array<i64: 128, 384>}, {pipeline_mode = #tpu.pipeline_mode<synchronous>, transform_indices = @transform_7, window_bounds = array<i64: 1, 384>}, {pipeline_mode = #tpu.pipeline_mode<synchronous>, transform_indices = @transform_8, window_bounds = array<i64: 128, 128>}, {pipeline_mode = #tpu.pipeline_mode<synchronous>, transform_indices = @transform_9, window_bounds = array<i64: 1, 128>}, {transform_indices = @transform_10, window_bounds = array<i64: 128, 128>}, {transform_indices = @transform_11, window_bounds = array<i64: 128, 128>}]} {
    %c0 = arith.constant 0 : index
    %c0_0 = arith.constant 0 : index
    %0 = vector.load %arg1[%c0, %c0_0] : memref<128x128xbf16, #tpu.memory_space<vmem>>, vector<128x128xbf16>
    %c0_1 = arith.constant 0 : index
    %c0_2 = arith.constant 0 : index
    %1 = vector.load %arg4[%c0_1, %c0_2] : memref<128x128xf32, #tpu.memory_space<vmem>>, vector<128x128xf32>
    %c0_3 = arith.constant 0 : index
    %c0_4 = arith.constant 0 : index
    %2 = vector.load %arg2[%c0_3, %c0_4] : memref<128x128xbf16, #tpu.memory_space<vmem>>, vector<128x128xbf16>
    %cst = arith.constant dense<0.000000e+00> : vector<128x128xf32>
    %3 = tpu.matmul %0, %2, %cst {dimension_numbers = #tpu.dot_dimension_numbers<[1], [0], [0], [1], [0, 0, 1, 1], [], []>} : vector<128x128xbf16>, vector<128x128xbf16>, vector<128x128xf32> -> vector<128x128xf32>
    %c0_5 = arith.constant 0 : index
    %c0_6 = arith.constant 0 : index
    %4 = vector.load %arg3[%c0_5, %c0_6] : memref<1x128xf32, #tpu.memory_space<vmem>>, vector<1x128xf32>
    %5 = vector.broadcast %4 : vector<1x128xf32> to vector<128x128xf32>
    %6 = arith.addf %3, %5 : vector<128x128xf32>
    %cst_7 = arith.constant 0.000000e+00 : f32
    %7 = vector.broadcast %cst_7 : f32 to vector<128x128xf32>
    %8 = arith.maximumf %6, %7 : vector<128x128xf32>
    %9 = arith.truncf %8 : vector<128x128xf32> to vector<128x128xbf16>
    %c0_8 = arith.constant 0 : index
    %c0_9 = arith.constant 0 : index
    %10 = vector.load %arg5[%c0_8, %c0_9] : memref<128x384xbf16, #tpu.memory_space<vmem>>, vector<128x384xbf16>
    %cst_10 = arith.constant dense<0.000000e+00> : vector<128x384xf32>
    %11 = tpu.matmul %9, %10, %cst_10 {dimension_numbers = #tpu.dot_dimension_numbers<[1], [0], [0], [1], [0, 0, 1, 1], [], []>} : vector<128x128xbf16>, vector<128x384xbf16>, vector<128x384xf32> -> vector<128x384xf32>
    %c0_11 = arith.constant 0 : index
    %c0_12 = arith.constant 0 : index
    %12 = vector.load %arg6[%c0_11, %c0_12] : memref<1x384xf32, #tpu.memory_space<vmem>>, vector<1x384xf32>
    %13 = vector.broadcast %12 : vector<1x384xf32> to vector<128x384xf32>
    %14 = arith.addf %11, %13 : vector<128x384xf32>
    %15 = arith.truncf %1 : vector<128x128xf32> to vector<128x128xbf16>
    %c0_13 = arith.constant 0 : index
    %c0_14 = arith.constant 0 : index
    %16 = vector.load %arg7[%c0_13, %c0_14] : memref<128x384xbf16, #tpu.memory_space<vmem>>, vector<128x384xbf16>
    %cst_15 = arith.constant dense<0.000000e+00> : vector<128x384xf32>
    %17 = tpu.matmul %15, %16, %cst_15 {dimension_numbers = #tpu.dot_dimension_numbers<[1], [0], [0], [1], [0, 0, 1, 1], [], []>} : vector<128x128xbf16>, vector<128x384xbf16>, vector<128x384xf32> -> vector<128x384xf32>
    %c0_16 = arith.constant 0 : index
    %c0_17 = arith.constant 0 : index
    %18 = vector.load %arg8[%c0_16, %c0_17] : memref<1x384xf32, #tpu.memory_space<vmem>>, vector<1x384xf32>
    %19 = vector.broadcast %18 : vector<1x384xf32> to vector<128x384xf32>
    %20 = arith.addf %17, %19 : vector<128x384xf32>
    %21 = vector.extract_strided_slice %14 {offsets = [0, 0], sizes = [128, 128], strides = [1, 1]} : vector<128x384xf32> to vector<128x128xf32>
    %22 = vector.extract_strided_slice %20 {offsets = [0, 0], sizes = [128, 128], strides = [1, 1]} : vector<128x384xf32> to vector<128x128xf32>
    %23 = arith.addf %21, %22 : vector<128x128xf32>
    %24 = arith.negf %23 : vector<128x128xf32>
    %25 = math.exp %24 : vector<128x128xf32>
    %cst_18 = arith.constant 1.000000e+00 : f32
    %26 = vector.broadcast %cst_18 : f32 to vector<128x128xf32>
    %27 = arith.addf %26, %25 : vector<128x128xf32>
    %28 = arith.divf %26, %27 : vector<128x128xf32>
    %29 = vector.extract_strided_slice %14 {offsets = [0, 128], sizes = [128, 128], strides = [1, 1]} : vector<128x384xf32> to vector<128x128xf32>
    %30 = vector.extract_strided_slice %20 {offsets = [0, 128], sizes = [128, 128], strides = [1, 1]} : vector<128x384xf32> to vector<128x128xf32>
    %31 = arith.addf %29, %30 : vector<128x128xf32>
    %32 = arith.negf %31 : vector<128x128xf32>
    %33 = math.exp %32 : vector<128x128xf32>
    %cst_19 = arith.constant 1.000000e+00 : f32
    %34 = vector.broadcast %cst_19 : f32 to vector<128x128xf32>
    %35 = arith.addf %34, %33 : vector<128x128xf32>
    %36 = arith.divf %34, %35 : vector<128x128xf32>
    %37 = vector.extract_strided_slice %14 {offsets = [0, 256], sizes = [128, 128], strides = [1, 1]} : vector<128x384xf32> to vector<128x128xf32>
    %38 = vector.extract_strided_slice %20 {offsets = [0, 256], sizes = [128, 128], strides = [1, 1]} : vector<128x384xf32> to vector<128x128xf32>
    %39 = arith.mulf %28, %38 : vector<128x128xf32>
    %40 = arith.addf %37, %39 : vector<128x128xf32>
    %41 = math.tanh %40 : vector<128x128xf32>
    %cst_20 = arith.constant 1.000000e+00 : f32
    %42 = vector.broadcast %cst_20 : f32 to vector<128x128xf32>
    %43 = arith.subf %42, %36 : vector<128x128xf32>
    %44 = arith.mulf %43, %41 : vector<128x128xf32>
    %45 = arith.mulf %36, %1 : vector<128x128xf32>
    %46 = arith.addf %44, %45 : vector<128x128xf32>
    %c128_i32 = arith.constant 128 : i32
    %47 = arith.muli %arg0, %c128_i32 : i32
    %48 = tpu.iota {dimensions = array<i32: 0>} : vector<128x1xi32>
    %49 = vector.broadcast %47 : i32 to vector<128x1xi32>
    %50 = arith.addi %49, %48 : vector<128x1xi32>
    %c32_i32 = arith.constant 32 : i32
    %51 = vector.broadcast %c32_i32 : i32 to vector<128x1xi32>
    %52 = arith.cmpi slt, %50, %51 : vector<128x1xi32>
    %cst_21 = arith.constant 0.000000e+00 : f32
    %53 = vector.shape_cast %52 : vector<128x1xi1> to vector<128x1xi1>
    %54 = vector.broadcast %53 : vector<128x1xi1> to vector<128x128xi1>
    %55 = vector.broadcast %cst_21 : f32 to vector<128x128xf32>
    %56 = arith.select %54, %46, %55 : vector<128x128xi1>, vector<128x128xf32>
    %57 = arith.truncf %56 : vector<128x128xf32> to vector<128x128xbf16>
    %c0_22 = arith.constant 0 : index
    %c0_23 = arith.constant 0 : index
    %58 = vector.load %arg9[%c0_22, %c0_23] : memref<128x128xbf16, #tpu.memory_space<vmem>>, vector<128x128xbf16>
    %cst_24 = arith.constant dense<0.000000e+00> : vector<128x128xf32>
    %59 = tpu.matmul %57, %58, %cst_24 {dimension_numbers = #tpu.dot_dimension_numbers<[1], [0], [0], [1], [0, 0, 1, 1], [], []>} : vector<128x128xbf16>, vector<128x128xbf16>, vector<128x128xf32> -> vector<128x128xf32>
    %c0_25 = arith.constant 0 : index
    %c0_26 = arith.constant 0 : index
    %60 = vector.load %arg10[%c0_25, %c0_26] : memref<1x128xf32, #tpu.memory_space<vmem>>, vector<1x128xf32>
    %61 = vector.broadcast %60 : vector<1x128xf32> to vector<128x128xf32>
    %62 = arith.addf %59, %61 : vector<128x128xf32>
    %cst_27 = arith.constant 0.000000e+00 : f32
    %63 = vector.shape_cast %52 : vector<128x1xi1> to vector<128x1xi1>
    %64 = vector.broadcast %63 : vector<128x1xi1> to vector<128x128xi1>
    %65 = vector.broadcast %cst_27 : f32 to vector<128x128xf32>
    %66 = arith.select %64, %62, %65 : vector<128x128xi1>, vector<128x128xf32>
    %c0_28 = arith.constant 0 : index
    %c0_29 = arith.constant 0 : index
    %67 = vector.load %arg11[%c0_28, %c0_29] : memref<128x128xf32, #tpu.memory_space<vmem>>, vector<128x128xf32>
    tpu.vector_store %arg11[%c0_28, %c0_29], %66 {strides = array<i32>} : memref<128x128xf32, #tpu.memory_space<vmem>>, vector<128x128xf32>,
    %c0_30 = arith.constant 0 : index
    %c0_31 = arith.constant 0 : index
    %68 = vector.load %arg12[%c0_30, %c0_31] : memref<128x128xf32, #tpu.memory_space<vmem>>, vector<128x128xf32>
    tpu.vector_store %arg12[%c0_30, %c0_31], %56 {strides = array<i32>} : memref<128x128xf32, #tpu.memory_space<vmem>>, vector<128x128xf32>,
    return
  }
  func.func @transform_0(%arg0: i32) -> (i32, i32) {
    %c0_i32 = arith.constant 0 : i32
    %c0_i32_0 = arith.constant 0 : i32
    return %arg0, %c0_i32 : i32, i32
  }
  func.func @transform_1(%arg0: i32) -> (i32, i32) {
    %c0_i32 = arith.constant 0 : i32
    %c0_i32_0 = arith.constant 0 : i32
    %c0_i32_1 = arith.constant 0 : i32
    return %c0_i32, %c0_i32_0 : i32, i32
  }
  func.func @transform_2(%arg0: i32) -> (i32, i32) {
    %c0_i32 = arith.constant 0 : i32
    %c0_i32_0 = arith.constant 0 : i32
    %c0_i32_1 = arith.constant 0 : i32
    return %c0_i32, %c0_i32_0 : i32, i32
  }
  func.func @transform_3(%arg0: i32) -> (i32, i32) {
    %c0_i32 = arith.constant 0 : i32
    %c0_i32_0 = arith.constant 0 : i32
    return %arg0, %c0_i32 : i32, i32
  }
  func.func @transform_4(%arg0: i32) -> (i32, i32) {
    %c0_i32 = arith.constant 0 : i32
    %c0_i32_0 = arith.constant 0 : i32
    %c0_i32_1 = arith.constant 0 : i32
    return %c0_i32, %c0_i32_0 : i32, i32
  }
  func.func @transform_5(%arg0: i32) -> (i32, i32) {
    %c0_i32 = arith.constant 0 : i32
    %c0_i32_0 = arith.constant 0 : i32
    %c0_i32_1 = arith.constant 0 : i32
    return %c0_i32, %c0_i32_0 : i32, i32
  }
  func.func @transform_6(%arg0: i32) -> (i32, i32) {
    %c0_i32 = arith.constant 0 : i32
    %c0_i32_0 = arith.constant 0 : i32
    %c0_i32_1 = arith.constant 0 : i32
    return %c0_i32, %c0_i32_0 : i32, i32
  }
  func.func @transform_7(%arg0: i32) -> (i32, i32) {
    %c0_i32 = arith.constant 0 : i32
    %c0_i32_0 = arith.constant 0 : i32
    %c0_i32_1 = arith.constant 0 : i32
    return %c0_i32, %c0_i32_0 : i32, i32
  }
  func.func @transform_8(%arg0: i32) -> (i32, i32) {
    %c0_i32 = arith.constant 0 : i32
    %c0_i32_0 = arith.constant 0 : i32
    %c0_i32_1 = arith.constant 0 : i32
    return %c0_i32, %c0_i32_0 : i32, i32
  }
  func.func @transform_9(%arg0: i32) -> (i32, i32) {
    %c0_i32 = arith.constant 0 : i32
    %c0_i32_0 = arith.constant 0 : i32
    %c0_i32_1 = arith.constant 0 : i32
    return %c0_i32, %c0_i32_0 : i32, i32
  }
  func.func @transform_10(%arg0: i32) -> (i32, i32) {
    %c0_i32 = arith.constant 0 : i32
    %c0_i32_0 = arith.constant 0 : i32
    return %arg0, %c0_i32 : i32, i32
  }
  func.func @transform_11(%arg0: i32) -> (i32, i32) {
    %c0_i32 = arith.constant 0 : i32
    %c0_i32_0 = arith.constant 0 : i32
    return %arg0, %c0_i32 : i32, i32
  }
}

</mosaic_0001>

<llo_original>
// kernel: graphrnn_forward.2
$region0: #{graphrnn_forward.2}
  #allocation0 [shape = 'u32[]', space=smem, size = 0x4, offset = 0x4, fixed_abs, tag = 'smem constant byte address 0x4 - core index']
  #allocation1 [shape = 'u32[144,128]{1,0:T(1,128)}', space=vmem, size = 0x12000, scoped, tag = 'internal scratch']
  %s0 = inlined_call_operand.vmem [shape: bf16[128,128], index: 0, kind: input, shape index: {}]
  %s1 = inlined_call_operand.vmem [shape: f32[128,1], index: 1, kind: input, shape index: {}]
  %s2 = inlined_call_operand.vmem [shape: f32[1,128], index: 2, kind: input, shape index: {}]
  %s3 = inlined_call_operand.vmem [shape: f32[1,128], index: 3, kind: input, shape index: {}]
  %s4 = inlined_call_operand.vmem [shape: bf16[128,128], index: 4, kind: input, shape index: {}]
  %s5 = inlined_call_operand.vmem [shape: bf16[128,128], index: 5, kind: output, shape index: {}]
  %s6 = sld [smem:[#allocation0]]
  $region30: #{graphrnn_forward.2} parent=0
    _
  %s8 = ssub.s32 1, %s6
  %s9 = scalar_select 0, %s8, %s6
  // Predicated region
  $region2: #{graphrnn_forward.2} parent=0 // pred_check
    _
  $region3: #{graphrnn_forward.2} parent=0 // pred_check_branch
    %11 = sbr.rel (0) target = $region5
  $region4: #{graphrnn_forward.2} parent=0 // pred_region
    _
  $region5: #{graphrnn_forward.2} parent=0 // pred_fallthru
    _
  // Predicated region
  $region6: #{graphrnn_forward.2} parent=0 // pred_check
    _
  $region7: #{graphrnn_forward.2} parent=0 // pred_check_branch
    %13 = sbr.rel (0) target = $region9
  $region8: #{graphrnn_forward.2} parent=0 // pred_region
    _
  $region9: #{graphrnn_forward.2} parent=0 // pred_fallthru
    _
  // Predicated region
  $region10: #{graphrnn_forward.2} parent=0 // pred_check
    _
  $region11: #{graphrnn_forward.2} parent=0 // pred_check_branch
    %15 = sbr.rel (0) target = $region13
  $region12: #{graphrnn_forward.2} parent=0 // pred_region
    _
  $region13: #{graphrnn_forward.2} parent=0 // pred_fallthru
    _
  // Predicated region
  $region14: #{graphrnn_forward.2} parent=0 // pred_check
    _
  $region15: #{graphrnn_forward.2} parent=0 // pred_check_branch
    %17 = sbr.rel (0) target = $region17
  $region16: #{graphrnn_forward.2} parent=0 // pred_region
    _
  $region17: #{graphrnn_forward.2} parent=0 // pred_fallthru
    _
  // Predicated region
  $region18: #{graphrnn_forward.2} parent=0 // pred_check
    _
  $region19: #{graphrnn_forward.2} parent=0 // pred_check_branch
    %19 = sbr.rel (0) target = $region21
  $region20: #{graphrnn_forward.2} parent=0 // pred_region
    _
  $region21: #{graphrnn_forward.2} parent=0 // pred_fallthru
    _
  %v21 = vld [vmem:[%s0] sm:$0xf]
  %v22 = vld [vmem:[%s0 + $0x4] sm:$0xf]
  %v23 = vld [vmem:[%s0 + $0x8] sm:$0xf]
  %v24 = vld [vmem:[%s0 + $0xc] sm:$0xf]
  %v25 = vld [vmem:[%s0 + $0x10] sm:$0xf]
  %v26 = vld [vmem:[%s0 + $0x14] sm:$0xf]
  %v27 = vld [vmem:[%s0 + $0x18] sm:$0xf]
  %v28 = vld [vmem:[%s0 + $0x1c] sm:$0xf]
  %v29 = vld [vmem:[%s0 + $0x20] sm:$0xf]
  %v30 = vld [vmem:[%s0 + $0x24] sm:$0xf]
  %v31 = vld [vmem:[%s0 + $0x28] sm:$0xf]
  %v32 = vld [vmem:[%s0 + $0x2c] sm:$0xf]
  %v33 = vld [vmem:[%s0 + $0x30] sm:$0xf]
  %v34 = vld [vmem:[%s0 + $0x34] sm:$0xf]
  %v35 = vld [vmem:[%s0 + $0x38] sm:$0xf]
  %v36 = vld [vmem:[%s0 + $0x3c] sm:$0xf]
  %v37 = vld [vmem:[%s1] sm:$0xff]
  %v38 = vld [vmem:[%s1 + $0x8] sm:$0xff]
  %v39 = vld [vmem:[%s1 + $0x10] sm:$0xff]
  %v40 = vld [vmem:[%s1 + $0x18] sm:$0xff]
  %v41 = vld [vmem:[%s1 + $0x20] sm:$0xff]
  %v42 = vld [vmem:[%s1 + $0x28] sm:$0xff]
  %v43 = vld [vmem:[%s1 + $0x30] sm:$0xff]
  %v44 = vld [vmem:[%s1 + $0x38] sm:$0xff]
  %v45 = vld [vmem:[%s1 + $0x40] sm:$0xff]
  %v46 = vld [vmem:[%s1 + $0x48] sm:$0xff]
  %v47 = vld [vmem:[%s1 + $0x50] sm:$0xff]
  %v48 = vld [vmem:[%s1 + $0x58] sm:$0xff]
  %v49 = vld [vmem:[%s1 + $0x60] sm:$0xff]
  %v50 = vld [vmem:[%s1 + $0x68] sm:$0xff]
  %v51 = vld [vmem:[%s1 + $0x70] sm:$0xff]
  %v52 = vld [vmem:[%s1 + $0x78] sm:$0xff]
  %v53 = vld [vmem:[%s2] sm:$0x1]
  %55 = vset.pattern.permute.xlu0 0
  %56 = vperm.xlu0 %55, %v37
  %v57 = vpop.permute.xlu0 %56
  %60 = vset.pattern.permute.xlu0 0
  %61 = vperm.xlu0 %60, %v38
  %v62 = vpop.permute.xlu0 %61
  %65 = vset.pattern.permute.xlu0 0
  %66 = vperm.xlu0 %65, %v39
  %v67 = vpop.permute.xlu0 %66
  %70 = vset.pattern.permute.xlu0 0
  %71 = vperm.xlu0 %70, %v40
  %v72 = vpop.permute.xlu0 %71
  %75 = vset.pattern.permute.xlu0 0
  %76 = vperm.xlu0 %75, %v41
  %v77 = vpop.permute.xlu0 %76
  %80 = vset.pattern.permute.xlu0 0
  %81 = vperm.xlu0 %80, %v42
  %v82 = vpop.permute.xlu0 %81
  %85 = vset.pattern.permute.xlu0 0
  %86 = vperm.xlu0 %85, %v43
  %v87 = vpop.permute.xlu0 %86
  %90 = vset.pattern.permute.xlu0 0
  %91 = vperm.xlu0 %90, %v44
  %v92 = vpop.permute.xlu0 %91
  %95 = vset.pattern.permute.xlu0 0
  %96 = vperm.xlu0 %95, %v45
  %v97 = vpop.permute.xlu0 %96
  %100 = vset.pattern.permute.xlu0 0
  %101 = vperm.xlu0 %100, %v46
  %v102 = vpop.permute.xlu0 %101
  %105 = vset.pattern.permute.xlu0 0
  %106 = vperm.xlu0 %105, %v47
  %v107 = vpop.permute.xlu0 %106
  %110 = vset.pattern.permute.xlu0 0
  %111 = vperm.xlu0 %110, %v48
  %v112 = vpop.permute.xlu0 %111
  %115 = vset.pattern.permute.xlu0 0
  %116 = vperm.xlu0 %115, %v49
  %v117 = vpop.permute.xlu0 %116
  %120 = vset.pattern.permute.xlu0 0
  %121 = vperm.xlu0 %120, %v50
  %v122 = vpop.permute.xlu0 %121
  %125 = vset.pattern.permute.xlu0 0
  %126 = vperm.xlu0 %125, %v51
  %v127 = vpop.permute.xlu0 %126
  %130 = vset.pattern.permute.xlu0 0
  %131 = vperm.xlu0 %130, %v52
  %v132 = vpop.permute.xlu0 %131
  %v135 = vlaneseq
  %v136 = vshrl.u32 %v135, 7
  %v137 = vsub.s32 0, %v136
  %v138 = vrot.slane %v53, %v137
  %v140 = vmul.f32 %v57, %v138
  %v141 = vmul.f32 %v62, %v138
  %v142 = vmul.f32 %v67, %v138
  %v143 = vmul.f32 %v72, %v138
  %v144 = vmul.f32 %v77, %v138
  %v145 = vmul.f32 %v82, %v138
  %v146 = vmul.f32 %v87, %v138
  %v147 = vmul.f32 %v92, %v138
  %v148 = vmul.f32 %v97, %v138
  %v149 = vmul.f32 %v102, %v138
  %v150 = vmul.f32 %v107, %v138
  %v151 = vmul.f32 %v112, %v138
  %v152 = vmul.f32 %v117, %v138
  %v153 = vmul.f32 %v122, %v138
  %v154 = vmul.f32 %v127, %v138
  %v155 = vmul.f32 %v132, %v138
  %v156 = vpack.c.bf16 %v141, %v140
  %v157 = vpack.c.bf16 %v143, %v142
  %v158 = vpack.c.bf16 %v145, %v144
  %v159 = vpack.c.bf16 %v147, %v146
  %v160 = vpack.c.bf16 %v149, %v148
  %v161 = vpack.c.bf16 %v151, %v150
  %v162 = vpack.c.bf16 %v153, %v152
  %v163 = vpack.c.bf16 %v155, %v154
  %v164 = vld [vmem:[%s3] sm:$0x1]
  %v166 = vlaneseq
  %v167 = vshrl.u32 %v166, 7
  %v168 = vsub.s32 0, %v167
  %v169 = vrot.slane %v164, %v168
  %v187 = vunpack.c.l.b16 %v21
  %v188 = vunpack.c.l.b16 %v22
  %v189 = vunpack.c.l.b16 %v23
  %v190 = vunpack.c.l.b16 %v24
  %v191 = vunpack.c.l.b16 %v25
  %v192 = vunpack.c.l.b16 %v26
  %v193 = vunpack.c.l.b16 %v27
  %v194 = vunpack.c.l.b16 %v28
  %v195 = vunpack.c.l.b16 %v29
  %v196 = vunpack.c.l.b16 %v30
  %v197 = vunpack.c.l.b16 %v31
  %v198 = vunpack.c.l.b16 %v32
  %v199 = vunpack.c.l.b16 %v33
  %v200 = vunpack.c.l.b16 %v34
  %v201 = vunpack.c.l.b16 %v35
  %v202 = vunpack.c.l.b16 %v36
  %v203 = vpack.c.b16 %v188, %v187
  %v204 = vpack.c.b16 %v190, %v189
  %v205 = vpack.c.b16 %v192, %v191
  %v206 = vpack.c.b16 %v194, %v193
  %v207 = vpack.c.b16 %v196, %v195
  %v208 = vpack.c.b16 %v198, %v197
  %v209 = vpack.c.b16 %v200, %v199
  %v210 = vpack.c.b16 %v202, %v201
  %219 = vmatprep.subr.bf16.mxu0 0
  %220 = vmatpush1.bf16.msra.mxu0 %v156
  %221 = vmatprep.subr.bf16.mxu0 0
  %222 = vmatpush1.bf16.msra.mxu0 %v157
  %223 = vmatprep.subr.bf16.mxu0 0
  %224 = vmatpush1.bf16.msra.mxu0 %v158
  %225 = vmatprep.subr.bf16.mxu0 0
  %226 = vmatpush1.bf16.msra.mxu0 %v159
  %227 = vmatprep.subr.bf16.mxu0 0
  %228 = vmatpush1.bf16.msra.mxu0 %v160
  %229 = vmatprep.subr.bf16.mxu0 0
  %230 = vmatpush1.bf16.msra.mxu0 %v161
  %231 = vmatprep.subr.bf16.mxu0 0
  %232 = vmatpush1.bf16.msra.mxu0 %v162
  %233 = vmatprep.subr.bf16.mxu0 0
  %234 = vmatpush1.bf16.msra.mxu0 %v163
  %235 = vmatprep.subr.bf16.mxu0 0
  %236 = vmatpush1.bf16.msra.mxu0 0
  %237 = vmatprep.subr.bf16.mxu0 0
  %238 = vmatpush1.bf16.msra.mxu0 0
  %239 = vmatprep.subr.bf16.mxu0 0
  %240 = vmatpush1.bf16.msra.mxu0 0
  %241 = vmatprep.subr.bf16.mxu0 0
  %242 = vmatpush1.bf16.msra.mxu0 0
  %243 = vmatprep.subr.bf16.mxu0 0
  %244 = vmatpush1.bf16.msra.mxu0 0
  %245 = vmatprep.subr.bf16.mxu0 0
  %246 = vmatpush1.bf16.msra.mxu0 0
  %247 = vmatprep.subr.bf16.mxu0 0
  %248 = vmatpush1.bf16.msra.mxu0 0
  %249 = vmatprep.subr.bf16.mxu0 0
  %250 = vmatpush1.bf16.msra.mxu0 0
  %251 = vmatprep.mubr.bf16.mxu0 0
  %252 = vmatmul.mubr.bf16.gmra.mrb[0].mxu0 %v203
  %v253 = vpop.f32.mrb[0].mxu0
  %v254 = vadd.f32 %v169, %v253
  %v255 = vpop.f32.mrb[0].mxu0
  %v256 = vpop.f32.mrb[0].mxu0
  %v257 = vadd.f32 %v169, %v256
  %v258 = vpop.f32.mrb[0].mxu0
  %259 = vmatprep.mubr.bf16.mxu0 0
  %260 = vmatmul.mubr.bf16.gmra.mrb[0].mxu0 %v204
  %v261 = vpop.f32.mrb[0].mxu0
  %v262 = vadd.f32 %v169, %v261
  %v263 = vpop.f32.mrb[0].mxu0
  %v264 = vpop.f32.mrb[0].mxu0
  %v265 = vadd.f32 %v169, %v264
  %v266 = vpop.f32.mrb[0].mxu0
  %267 = vmatprep.mubr.bf16.mxu0 0
  %268 = vmatmul.mubr.bf16.gmra.mrb[0].mxu0 %v205
  %v269 = vpop.f32.mrb[0].mxu0
  %v270 = vadd.f32 %v169, %v269
  %v271 = vpop.f32.mrb[0].mxu0
  %v272 = vpop.f32.mrb[0].mxu0
  %v273 = vadd.f32 %v169, %v272
  %v274 = vpop.f32.mrb[0].mxu0
  %275 = vmatprep.mubr.bf16.mxu0 0
  %276 = vmatmul.mubr.bf16.gmra.mrb[0].mxu0 %v206
  %v277 = vpop.f32.mrb[0].mxu0
  %v278 = vadd.f32 %v169, %v277
  %v279 = vpop.f32.mrb[0].mxu0
  %v280 = vpop.f32.mrb[0].mxu0
  %v281 = vadd.f32 %v169, %v280
  %v282 = vpop.f32.mrb[0].mxu0
  %283 = vmatprep.mubr.bf16.mxu0 0
  %284 = vmatmul.mubr.bf16.gmra.mrb[0].mxu0 %v207
  %v285 = vpop.f32.mrb[0].mxu0
  %v286 = vadd.f32 %v169, %v285
  %v287 = vpop.f32.mrb[0].mxu0
  %v288 = vpop.f32.mrb[0].mxu0
  %v289 = vadd.f32 %v169, %v288
  %v290 = vpop.f32.mrb[0].mxu0
  %291 = vmatprep.mubr.bf16.mxu0 0
  %292 = vmatmul.mubr.bf16.gmra.mrb[0].mxu0 %v208
  %v293 = vpop.f32.mrb[0].mxu0
  %v294 = vadd.f32 %v169, %v293
  %v295 = vpop.f32.mrb[0].mxu0
  %v296 = vpop.f32.mrb[0].mxu0
  %v297 = vadd.f32 %v169, %v296
  %v298 = vpop.f32.mrb[0].mxu0
  %299 = vmatprep.mubr.bf16.mxu0 0
  %300 = vmatmul.mubr.bf16.gmra.mrb[0].mxu0 %v209
  %v301 = vpop.f32.mrb[0].mxu0
  %v302 = vadd.f32 %v169, %v301
  %v303 = vpop.f32.mrb[0].mxu0
  %v304 = vpop.f32.mrb[0].mxu0
  %v305 = vadd.f32 %v169, %v304
  %v306 = vpop.f32.mrb[0].mxu0
  %307 = vmatprep.mubr.bf16.mxu0 0
  %308 = vmatmul.mubr.bf16.gmra.mrb[0].mxu0 %v210
  %v309 = vpop.f32.mrb[0].mxu0
  %v310 = vadd.f32 %v169, %v309
  %v311 = vpop.f32.mrb[0].mxu0
  %v312 = vpop.f32.mrb[0].mxu0
  %v313 = vadd.f32 %v169, %v312
  %v314 = vpop.f32.mrb[0].mxu0
  %315 = vdwg.mxu0
  %v316 = vmax.f32 %v254, 0.0
  %v317 = vmax.f32 %v257, 0.0
  %v318 = vmax.f32 %v262, 0.0
  %v319 = vmax.f32 %v265, 0.0
  %v320 = vmax.f32 %v270, 0.0
  %v321 = vmax.f32 %v273, 0.0
  %v322 = vmax.f32 %v278, 0.0
  %v323 = vmax.f32 %v281, 0.0
  %v324 = vmax.f32 %v286, 0.0
  %v325 = vmax.f32 %v289, 0.0
  %v326 = vmax.f32 %v294, 0.0
  %v327 = vmax.f32 %v297, 0.0
  %v328 = vmax.f32 %v302, 0.0
  %v329 = vmax.f32 %v305, 0.0
  %v330 = vmax.f32 %v310, 0.0
  %v331 = vmax.f32 %v313, 0.0
  %v332 = vpack.c.bf16 %v317, %v316
  %v333 = vpack.c.bf16 %v319, %v318
  %v334 = vpack.c.bf16 %v321, %v320
  %v335 = vpack.c.bf16 %v323, %v322
  %v336 = vpack.c.bf16 %v325, %v324
  %v337 = vpack.c.bf16 %v327, %v326
  %v338 = vpack.c.bf16 %v329, %v328
  %v339 = vpack.c.bf16 %v331, %v330
  %v340 = vld [vmem:[%s4] sm:$0xf]
  %v341 = vld [vmem:[%s4 + $0x4] sm:$0xf]
  %v342 = vld [vmem:[%s4 + $0x8] sm:$0xf]
  %v343 = vld [vmem:[%s4 + $0xc] sm:$0xf]
  %v344 = vld [vmem:[%s4 + $0x10] sm:$0xf]
  %v345 = vld [vmem:[%s4 + $0x14] sm:$0xf]
  %v346 = vld [vmem:[%s4 + $0x18] sm:$0xf]
  %v347 = vld [vmem:[%s4 + $0x1c] sm:$0xf]
  %v348 = vld [vmem:[%s4 + $0x20] sm:$0xf]
  %v349 = vld [vmem:[%s4 + $0x24] sm:$0xf]
  %v350 = vld [vmem:[%s4 + $0x28] sm:$0xf]
  %v351 = vld [vmem:[%s4 + $0x2c] sm:$0xf]
  %v352 = vld [vmem:[%s4 + $0x30] sm:$0xf]
  %v353 = vld [vmem:[%s4 + $0x34] sm:$0xf]
  %v354 = vld [vmem:[%s4 + $0x38] sm:$0xf]
  %v355 = vld [vmem:[%s4 + $0x3c] sm:$0xf]
  %v372 = vunpack.c.l.b16 %v340
  %v373 = vunpack.c.l.b16 %v341
  %v374 = vunpack.c.l.b16 %v342
  %v375 = vunpack.c.l.b16 %v343
  %v376 = vunpack.c.l.b16 %v344
  %v377 = vunpack.c.l.b16 %v345
  %v378 = vunpack.c.l.b16 %v346
  %v379 = vunpack.c.l.b16 %v347
  %v380 = vunpack.c.l.b16 %v348
  %v381 = vunpack.c.l.b16 %v349
  %v382 = vunpack.c.l.b16 %v350
  %v383 = vunpack.c.l.b16 %v351
  %v384 = vunpack.c.l.b16 %v352
  %v385 = vunpack.c.l.b16 %v353
  %v386 = vunpack.c.l.b16 %v354
  %v387 = vunpack.c.l.b16 %v355
  %v388 = vpack.c.b16 %v373, %v372
  %v389 = vpack.c.b16 %v375, %v374
  %v390 = vpack.c.b16 %v377, %v376
  %v391 = vpack.c.b16 %v379, %v378
  %v392 = vpack.c.b16 %v381, %v380
  %v393 = vpack.c.b16 %v383, %v382
  %v394 = vpack.c.b16 %v385, %v384
  %v395 = vpack.c.b16 %v387, %v386
  %404 = vmatprep.subr.bf16.mxu0 0
  %405 = vmatpush1.bf16.msra.mxu0 %v388
  %406 = vmatprep.subr.bf16.mxu0 0
  %407 = vmatpush1.bf16.msra.mxu0 %v389
  %408 = vmatprep.subr.bf16.mxu0 0
  %409 = vmatpush1.bf16.msra.mxu0 %v390
  %410 = vmatprep.subr.bf16.mxu0 0
  %411 = vmatpush1.bf16.msra.mxu0 %v391
  %412 = vmatprep.subr.bf16.mxu0 0
  %413 = vmatpush1.bf16.msra.mxu0 %v392
  %414 = vmatprep.subr.bf16.mxu0 0
  %415 = vmatpush1.bf16.msra.mxu0 %v393
  %416 = vmatprep.subr.bf16.mxu0 0
  %417 = vmatpush1.bf16.msra.mxu0 %v394
  %418 = vmatprep.subr.bf16.mxu0 0
  %419 = vmatpush1.bf16.msra.mxu0 %v395
  %420 = vmatprep.subr.bf16.mxu0 0
  %421 = vmatpush1.bf16.msra.mxu0 0
  %422 = vmatprep.subr.bf16.mxu0 0
  %423 = vmatpush1.bf16.msra.mxu0 0
  %424 = vmatprep.subr.bf16.mxu0 0
  %425 = vmatpush1.bf16.msra.mxu0 0
  %426 = vmatprep.subr.bf16.mxu0 0
  %427 = vmatpush1.bf16.msra.mxu0 0
  %428 = vmatprep.subr.bf16.mxu0 0
  %429 = vmatpush1.bf16.msra.mxu0 0
  %430 = vmatprep.subr.bf16.mxu0 0
  %431 = vmatpush1.bf16.msra.mxu0 0
  %432 = vmatprep.subr.bf16.mxu0 0
  %433 = vmatpush1.bf16.msra.mxu0 0
  %434 = vmatprep.subr.bf16.mxu0 0
  %435 = vmatpush1.bf16.msra.mxu0 0
  %436 = vmatprep.mubr.bf16.mxu0 0
  %437 = vmatmul.mubr.bf16.gmra.mrb[0].mxu0 %v332
  %v438 = vpop.f32.mrb[0].mxu0
  %v439 = vadd.f32 0.0, %v438
  %v440 = vpop.f32.mrb[0].mxu0
  %v441 = vpop.f32.mrb[0].mxu0
  %v442 = vadd.f32 0.0, %v441
  %v443 = vpop.f32.mrb[0].mxu0
  %444 = vmatprep.mubr.bf16.mxu0 0
  %445 = vmatmul.mubr.bf16.gmra.mrb[0].mxu0 %v333
  %v446 = vpop.f32.mrb[0].mxu0
  %v447 = vadd.f32 0.0, %v446
  %v448 = vpop.f32.mrb[0].mxu0
  %v449 = vpop.f32.mrb[0].mxu0
  %v450 = vadd.f32 0.0, %v449
  %v451 = vpop.f32.mrb[0].mxu0
  %452 = vmatprep.mubr.bf16.mxu0 0
  %453 = vmatmul.mubr.bf16.gmra.mrb[0].mxu0 %v334
  %v454 = vpop.f32.mrb[0].mxu0
  %v455 = vadd.f32 0.0, %v454
  %v456 = vpop.f32.mrb[0].mxu0
  %v457 = vpop.f32.mrb[0].mxu0
  %v458 = vadd.f32 0.0, %v457
  %v459 = vpop.f32.mrb[0].mxu0
  %460 = vmatprep.mubr.bf16.mxu0 0
  %461 = vmatmul.mubr.bf16.gmra.mrb[0].mxu0 %v335
  %v462 = vpop.f32.mrb[0].mxu0
  %v463 = vadd.f32 0.0, %v462
  %v464 = vpop.f32.mrb[0].mxu0
  %v465 = vpop.f32.mrb[0].mxu0
  %v466 = vadd.f32 0.0, %v465
  %v467 = vpop.f32.mrb[0].mxu0
  %468 = vmatprep.mubr.bf16.mxu0 0
  %469 = vmatmul.mubr.bf16.gmra.mrb[0].mxu0 %v336
  %v470 = vpop.f32.mrb[0].mxu0
  %v471 = vadd.f32 0.0, %v470
  %v472 = vpop.f32.mrb[0].mxu0
  %v473 = vpop.f32.mrb[0].mxu0
  %v474 = vadd.f32 0.0, %v473
  %v475 = vpop.f32.mrb[0].mxu0
  %476 = vmatprep.mubr.bf16.mxu0 0
  %477 = vmatmul.mubr.bf16.gmra.mrb[0].mxu0 %v337
  %v478 = vpop.f32.mrb[0].mxu0
  %v479 = vadd.f32 0.0, %v478
  %v480 = vpop.f32.mrb[0].mxu0
  %v481 = vpop.f32.mrb[0].mxu0
  %v482 = vadd.f32 0.0, %v481
  %v483 = vpop.f32.mrb[0].mxu0
  %484 = vmatprep.mubr.bf16.mxu0 0
  %485 = vmatmul.mubr.bf16.gmra.mrb[0].mxu0 %v338
  %v486 = vpop.f32.mrb[0].mxu0
  %v487 = vadd.f32 0.0, %v486
  %v488 = vpop.f32.mrb[0].mxu0
  %v489 = vpop.f32.mrb[0].mxu0
  %v490 = vadd.f32 0.0, %v489
  %v491 = vpop.f32.mrb[0].mxu0
  %492 = vmatprep.mubr.bf16.mxu0 0
  %493 = vmatmul.mubr.bf16.gmra.mrb[0].mxu0 %v339
  %v494 = vpop.f32.mrb[0].mxu0
  %v495 = vadd.f32 0.0, %v494
  %v496 = vpop.f32.mrb[0].mxu0
  %v497 = vpop.f32.mrb[0].mxu0
  %v498 = vadd.f32 0.0, %v497
  %v499 = vpop.f32.mrb[0].mxu0
  %500 = vdwg.mxu0
  %v501 = vpack.c.bf16 %v442, %v439
  %v502 = vpack.c.bf16 %v450, %v447
  %v503 = vpack.c.bf16 %v458, %v455
  %v504 = vpack.c.bf16 %v466, %v463
  %v505 = vpack.c.bf16 %v474, %v471
  %v506 = vpack.c.bf16 %v482, %v479
  %v507 = vpack.c.bf16 %v490, %v487
  %v508 = vpack.c.bf16 %v498, %v495
  %v517 = vunpack.c.l.b16 %v501
  %v518 = vunpack.c.h.b16 %v501
  %v519 = vunpack.c.l.b16 %v502
  %v520 = vunpack.c.h.b16 %v502
  %v521 = vunpack.c.l.b16 %v503
  %v522 = vunpack.c.h.b16 %v503
  %v523 = vunpack.c.l.b16 %v504
  %v524 = vunpack.c.h.b16 %v504
  %v525 = vunpack.c.l.b16 %v505
  %v526 = vunpack.c.h.b16 %v505
  %v527 = vunpack.c.l.b16 %v506
  %v528 = vunpack.c.h.b16 %v506
  %v529 = vunpack.c.l.b16 %v507
  %v530 = vunpack.c.h.b16 %v507
  %v531 = vunpack.c.l.b16 %v508
  %v532 = vunpack.c.h.b16 %v508
  %v533 = vpack.c.b16 %v517, %v517
  %v534 = vpack.c.b16 %v518, %v518
  %v535 = vpack.c.b16 %v519, %v519
  %v536 = vpack.c.b16 %v520, %v520
  %v537 = vpack.c.b16 %v521, %v521
  %v538 = vpack.c.b16 %v522, %v522
  %v539 = vpack.c.b16 %v523, %v523
  %v540 = vpack.c.b16 %v524, %v524
  %v541 = vpack.c.b16 %v525, %v525
  %v542 = vpack.c.b16 %v526, %v526
  %v543 = vpack.c.b16 %v527, %v527
  %v544 = vpack.c.b16 %v528, %v528
  %v545 = vpack.c.b16 %v529, %v529
  %v546 = vpack.c.b16 %v530, %v530
  %v547 = vpack.c.b16 %v531, %v531
  %v548 = vpack.c.b16 %v532, %v532
  %565 = vst [vmem:[%s5] sm:$0xf] %v533
  %566 = vst [vmem:[%s5 + $0x4] sm:$0xf] %v534
  %567 = vst [vmem:[%s5 + $0x8] sm:$0xf] %v535
  %568 = vst [vmem:[%s5 + $0xc] sm:$0xf] %v536
  %569 = vst [vmem:[%s5 + $0x10] sm:$0xf] %v537
  %570 = vst [vmem:[%s5 + $0x14] sm:$0xf] %v538
  %571 = vst [vmem:[%s5 + $0x18] sm:$0xf] %v539
  %572 = vst [vmem:[%s5 + $0x1c] sm:$0xf] %v540
  %573 = vst [vmem:[%s5 + $0x20] sm:$0xf] %v541
  %574 = vst [vmem:[%s5 + $0x24] sm:$0xf] %v542
  %575 = vst [vmem:[%s5 + $0x28] sm:$0xf] %v543
  %576 = vst [vmem:[%s5 + $0x2c] sm:$0xf] %v544
  %577 = vst [vmem:[%s5 + $0x30] sm:$0xf] %v545
  %578 = vst [vmem:[%s5 + $0x34] sm:$0xf] %v546
  %579 = vst [vmem:[%s5 + $0x38] sm:$0xf] %v547
  %580 = vst [vmem:[%s5 + $0x3c] sm:$0xf] %v548
  // Predicated region
  $region22: #{graphrnn_forward.2} parent=0 // pred_check
    _
  $region23: #{graphrnn_forward.2} parent=0 // pred_check_branch
    %582 = sbr.rel (0) target = $region25
  $region24: #{graphrnn_forward.2} parent=0 // pred_region
    _
  $region25: #{graphrnn_forward.2} parent=0 // pred_fallthru
    _
  // Predicated region
  $region26: #{graphrnn_forward.2} parent=0 // pred_check
    _
  $region27: #{graphrnn_forward.2} parent=0 // pred_check_branch
    %584 = sbr.rel (0) target = $region29
  $region28: #{graphrnn_forward.2} parent=0 // pred_region
    _
  $region29: #{graphrnn_forward.2} parent=0 // pred_fallthru
    _

// kernel: graphrnn_forward.3
$region0: #{graphrnn_forward.3}
  #allocation0 [shape = 'u32[]', space=smem, size = 0x4, offset = 0x4, fixed_abs, tag = 'smem constant byte address 0x4 - core index']
  #allocation1 [shape = 'u32[144,128]{1,0:T(1,128)}', space=vmem, size = 0x12000, scoped, tag = 'internal scratch']
  %s0 = inlined_call_operand.vmem [shape: bf16[128,128], index: 0, kind: input, shape index: {}]
  %s1 = inlined_call_operand.vmem [shape: bf16[128,128], index: 1, kind: input, shape index: {}]
  %s2 = inlined_call_operand.vmem [shape: f32[1,128], index: 2, kind: input, shape index: {}]
  %s3 = inlined_call_operand.vmem [shape: f32[128,128], index: 3, kind: input, shape index: {}, may-alias: {3,11}]
  %s4 = inlined_call_operand.vmem [shape: bf16[128,384], index: 4, kind: input, shape index: {}]
  %s5 = inlined_call_operand.vmem [shape: f32[1,384], index: 5, kind: input, shape index: {}]
  %s6 = inlined_call_operand.vmem [shape: bf16[128,384], index: 6, kind: input, shape index: {}]
  %s7 = inlined_call_operand.vmem [shape: f32[1,384], index: 7, kind: input, shape index: {}]
  %s8 = inlined_call_operand.vmem [shape: bf16[128,128], index: 8, kind: input, shape index: {}]
  %s9 = inlined_call_operand.vmem [shape: f32[1,128], index: 9, kind: input, shape index: {}]
  %s10 = inlined_call_operand.vmem [shape: f32[128,128], index: 10, kind: output, shape index: {0}]
  %s11 = inlined_call_operand.vmem [shape: f32[128,128], index: 11, kind: output, shape index: {1}, may-alias: {3,11}]
  %12 = xla_tuple %s10, %s11
  %s13 = sld [smem:[#allocation0]]
  $region58: #{graphrnn_forward.3} parent=0
    _
  %s15 = ssub.s32 1, %s13
  %s16 = scalar_select 0, %s15, %s13
  // Predicated region
  $region2: #{graphrnn_forward.3} parent=0 // pred_check
    _
  $region3: #{graphrnn_forward.3} parent=0 // pred_check_branch
    %18 = sbr.rel (0) target = $region5
  $region4: #{graphrnn_forward.3} parent=0 // pred_region
    _
  $region5: #{graphrnn_forward.3} parent=0 // pred_fallthru
    _
  // Predicated region
  $region6: #{graphrnn_forward.3} parent=0 // pred_check
    _
  $region7: #{graphrnn_forward.3} parent=0 // pred_check_branch
    %20 = sbr.rel (0) target = $region9
  $region8: #{graphrnn_forward.3} parent=0 // pred_region
    _
  $region9: #{graphrnn_forward.3} parent=0 // pred_fallthru
    _
  // Predicated region
  $region10: #{graphrnn_forward.3} parent=0 // pred_check
    _
  $region11: #{graphrnn_forward.3} parent=0 // pred_check_branch
    %22 = sbr.rel (0) target = $region13
  $region12: #{graphrnn_forward.3} parent=0 // pred_region
    _
  $region13: #{graphrnn_forward.3} parent=0 // pred_fallthru
    _
  // Predicated region
  $region14: #{graphrnn_forward.3} parent=0 // pred_check
    _
  $region15: #{graphrnn_forward.3} parent=0 // pred_check_branch
    %24 = sbr.rel (0) target = $region17
  $region16: #{graphrnn_forward.3} parent=0 // pred_region
    _
  $region17: #{graphrnn_forward.3} parent=0 // pred_fallthru
    _
  // Predicated region
  $region18: #{graphrnn_forward.3} parent=0 // pred_check
    _
  $region19: #{graphrnn_forward.3} parent=0 // pred_check_branch
    %26 = sbr.rel (0) target = $region21
  $region20: #{graphrnn_forward.3} parent=0 // pred_region
    _
  $region21: #{graphrnn_forward.3} parent=0 // pred_fallthru
    _
  // Predicated region
  $region22: #{graphrnn_forward.3} parent=0 // pred_check
    _
  $region23: #{graphrnn_forward.3} parent=0 // pred_check_branch
    %28 = sbr.rel (0) target = $region25
  $region24: #{graphrnn_forward.3} parent=0 // pred_region
    _
  $region25: #{graphrnn_forward.3} parent=0 // pred_fallthru
    _
  // Predicated region
  $region26: #{graphrnn_forward.3} parent=0 // pred_check
    _
  $region27: #{graphrnn_forward.3} parent=0 // pred_check_branch
    %30 = sbr.rel (0) target = $region29
  $region28: #{graphrnn_forward.3} parent=0 // pred_region
    _
  $region29: #{graphrnn_forward.3} parent=0 // pred_fallthru
    _
  // Predicated region
  $region30: #{graphrnn_forward.3} parent=0 // pred_check
    _
  $region31: #{graphrnn_forward.3} parent=0 // pred_check_branch
    %32 = sbr.rel (0) target = $region33
  $region32: #{graphrnn_forward.3} parent=0 // pred_region
    _
  $region33: #{graphrnn_forward.3} parent=0 // pred_fallthru
    _
  // Predicated region
  $region34: #{graphrnn_forward.3} parent=0 // pred_check
    _
  $region35: #{graphrnn_forward.3} parent=0 // pred_check_branch
    %34 = sbr.rel (0) target = $region37
  $region36: #{graphrnn_forward.3} parent=0 // pred_region
    _
  $region37: #{graphrnn_forward.3} parent=0 // pred_fallthru
    _
  // Predicated region
  $region38: #{graphrnn_forward.3} parent=0 // pred_check
    _
  $region39: #{graphrnn_forward.3} parent=0 // pred_check_branch
    %36 = sbr.rel (0) target = $region41
  $region40: #{graphrnn_forward.3} parent=0 // pred_region
    _
  $region41: #{graphrnn_forward.3} parent=0 // pred_fallthru
    _
  %v38 = vld [vmem:[%s0] sm:$0xf]
  %v39 = vld [vmem:[%s0 + $0x4] sm:$0xf]
  %v40 = vld [vmem:[%s0 + $0x8] sm:$0xf]
  %v41 = vld [vmem:[%s0 + $0xc] sm:$0xf]
  %v42 = vld [vmem:[%s0 + $0x10] sm:$0xf]
  %v43 = vld [vmem:[%s0 + $0x14] sm:$0xf]
  %v44 = vld [vmem:[%s0 + $0x18] sm:$0xf]
  %v45 = vld [vmem:[%s0 + $0x1c] sm:$0xf]
  %v46 = vld [vmem:[%s0 + $0x20] sm:$0xf]
  %v47 = vld [vmem:[%s0 + $0x24] sm:$0xf]
  %v48 = vld [vmem:[%s0 + $0x28] sm:$0xf]
  %v49 = vld [vmem:[%s0 + $0x2c] sm:$0xf]
  %v50 = vld [vmem:[%s0 + $0x30] sm:$0xf]
  %v51 = vld [vmem:[%s0 + $0x34] sm:$0xf]
  %v52 = vld [vmem:[%s0 + $0x38] sm:$0xf]
  %v53 = vld [vmem:[%s0 + $0x3c] sm:$0xf]
  %v54 = vld [vmem:[%s3] sm:$0xff]
  %v55 = vld [vmem:[%s3 + $0x8] sm:$0xff]
  %v56 = vld [vmem:[%s3 + $0x10] sm:$0xff]
  %v57 = vld [vmem:[%s3 + $0x18] sm:$0xff]
  %v58 = vld [vmem:[%s3 + $0x20] sm:$0xff]
  %v59 = vld [vmem:[%s3 + $0x28] sm:$0xff]
  %v60 = vld [vmem:[%s3 + $0x30] sm:$0xff]
  %v61 = vld [vmem:[%s3 + $0x38] sm:$0xff]
  %v62 = vld [vmem:[%s3 + $0x40] sm:$0xff]
  %v63 = vld [vmem:[%s3 + $0x48] sm:$0xff]
  %v64 = vld [vmem:[%s3 + $0x50] sm:$0xff]
  %v65 = vld [vmem:[%s3 + $0x58] sm:$0xff]
  %v66 = vld [vmem:[%s3 + $0x60] sm:$0xff]
  %v67 = vld [vmem:[%s3 + $0x68] sm:$0xff]
  %v68 = vld [vmem:[%s3 + $0x70] sm:$0xff]
  %v69 = vld [vmem:[%s3 + $0x78] sm:$0xff]
  %v70 = vld [vmem:[%s1] sm:$0xf]
  %v71 = vld [vmem:[%s1 + $0x4] sm:$0xf]
  %v72 = vld [vmem:[%s1 + $0x8] sm:$0xf]
  %v73 = vld [vmem:[%s1 + $0xc] sm:$0xf]
  %v74 = vld [vmem:[%s1 + $0x10] sm:$0xf]
  %v75 = vld [vmem:[%s1 + $0x14] sm:$0xf]
  %v76 = vld [vmem:[%s1 + $0x18] sm:$0xf]
  %v77 = vld [vmem:[%s1 + $0x1c] sm:$0xf]
  %v78 = vld [vmem:[%s1 + $0x20] sm:$0xf]
  %v79 = vld [vmem:[%s1 + $0x24] sm:$0xf]
  %v80 = vld [vmem:[%s1 + $0x28] sm:$0xf]
  %v81 = vld [vmem:[%s1 + $0x2c] sm:$0xf]
  %v82 = vld [vmem:[%s1 + $0x30] sm:$0xf]
  %v83 = vld [vmem:[%s1 + $0x34] sm:$0xf]
  %v84 = vld [vmem:[%s1 + $0x38] sm:$0xf]
  %v85 = vld [vmem:[%s1 + $0x3c] sm:$0xf]
  %v86 = vld [vmem:[%s2] sm:$0x1]
  %v88 = vlaneseq
  %v89 = vshrl.u32 %v88, 7
  %v90 = vsub.s32 0, %v89
  %v91 = vrot.slane %v86, %v90
  %v109 = vunpack.c.l.b16 %v38
  %v110 = vunpack.c.l.b16 %v39
  %v111 = vunpack.c.l.b16 %v40
  %v112 = vunpack.c.l.b16 %v41
  %v113 = vunpack.c.l.b16 %v42
  %v114 = vunpack.c.l.b16 %v43
  %v115 = vunpack.c.l.b16 %v44
  %v116 = vunpack.c.l.b16 %v45
  %v117 = vunpack.c.l.b16 %v46
  %v118 = vunpack.c.l.b16 %v47
  %v119 = vunpack.c.l.b16 %v48
  %v120 = vunpack.c.l.b16 %v49
  %v121 = vunpack.c.l.b16 %v50
  %v122 = vunpack.c.l.b16 %v51
  %v123 = vunpack.c.l.b16 %v52
  %v124 = vunpack.c.l.b16 %v53
  %v125 = vpack.c.b16 %v110, %v109
  %v126 = vpack.c.b16 %v112, %v111
  %v127 = vpack.c.b16 %v114, %v113
  %v128 = vpack.c.b16 %v116, %v115
  %v129 = vpack.c.b16 %v118, %v117
  %v130 = vpack.c.b16 %v120, %v119
  %v131 = vpack.c.b16 %v122, %v121
  %v132 = vpack.c.b16 %v124, %v123
  %v157 = vunpack.c.l.b16 %v70
  %v158 = vunpack.c.l.b16 %v71
  %v159 = vunpack.c.l.b16 %v72
  %v160 = vunpack.c.l.b16 %v73
  %v161 = vunpack.c.l.b16 %v74
  %v162 = vunpack.c.l.b16 %v75
  %v163 = vunpack.c.l.b16 %v76
  %v164 = vunpack.c.l.b16 %v77
  %v165 = vunpack.c.l.b16 %v78
  %v166 = vunpack.c.l.b16 %v79
  %v167 = vunpack.c.l.b16 %v80
  %v168 = vunpack.c.l.b16 %v81
  %v169 = vunpack.c.l.b16 %v82
  %v170 = vunpack.c.l.b16 %v83
  %v171 = vunpack.c.l.b16 %v84
  %v172 = vunpack.c.l.b16 %v85
  %v173 = vpack.c.b16 %v158, %v157
  %v174 = vpack.c.b16 %v160, %v159
  %v175 = vpack.c.b16 %v162, %v161
  %v176 = vpack.c.b16 %v164, %v163
  %v177 = vpack.c.b16 %v166, %v165
  %v178 = vpack.c.b16 %v168, %v167
  %v179 = vpack.c.b16 %v170, %v169
  %v180 = vpack.c.b16 %v172, %v171
  %189 = vmatprep.subr.bf16.mxu0 0
  %190 = vmatpush1.bf16.msra.mxu0 %v173
  %191 = vmatprep.subr.bf16.mxu0 0
  %192 = vmatpush1.bf16.msra.mxu0 %v174
  %193 = vmatprep.subr.bf16.mxu0 0
  %194 = vmatpush1.bf16.msra.mxu0 %v175
  %195 = vmatprep.subr.bf16.mxu0 0
  %196 = vmatpush1.bf16.msra.mxu0 %v176
  %197 = vmatprep.subr.bf16.mxu0 0
  %198 = vmatpush1.bf16.msra.mxu0 %v177
  %199 = vmatprep.subr.bf16.mxu0 0
  %200 = vmatpush1.bf16.msra.mxu0 %v178
  %201 = vmatprep.subr.bf16.mxu0 0
  %202 = vmatpush1.bf16.msra.mxu0 %v179
  %203 = vmatprep.subr.bf16.mxu0 0
  %204 = vmatpush1.bf16.msra.mxu0 %v180
  %205 = vmatprep.subr.bf16.mxu0 0
  %206 = vmatpush1.bf16.msra.mxu0 0
  %207 = vmatprep.subr.bf16.mxu0 0
  %208 = vmatpush1.bf16.msra.mxu0 0
  %209 = vmatprep.subr.bf16.mxu0 0
  %210 = vmatpush1.bf16.msra.mxu0 0
  %211 = vmatprep.subr.bf16.mxu0 0
  %212 = vmatpush1.bf16.msra.mxu0 0
  %213 = vmatprep.subr.bf16.mxu0 0
  %214 = vmatpush1.bf16.msra.mxu0 0
  %215 = vmatprep.subr.bf16.mxu0 0
  %216 = vmatpush1.bf16.msra.mxu0 0
  %217 = vmatprep.subr.bf16.mxu0 0
  %218 = vmatpush1.bf16.msra.mxu0 0
  %219 = vmatprep.subr.bf16.mxu0 0
  %220 = vmatpush1.bf16.msra.mxu0 0
  %221 = vmatprep.mubr.bf16.mxu0 0
  %222 = vmatmul.mubr.bf16.gmra.mrb[0].mxu0 %v125
  %v223 = vpop.f32.mrb[0].mxu0
  %v224 = vadd.f32 %v91, %v223
  %v225 = vpop.f32.mrb[0].mxu0
  %v226 = vpop.f32.mrb[0].mxu0
  %v227 = vadd.f32 %v91, %v226
  %v228 = vpop.f32.mrb[0].mxu0
  %229 = vmatprep.mubr.bf16.mxu0 0
  %230 = vmatmul.mubr.bf16.gmra.mrb[0].mxu0 %v126
  %v231 = vpop.f32.mrb[0].mxu0
  %v232 = vadd.f32 %v91, %v231
  %v233 = vpop.f32.mrb[0].mxu0
  %v234 = vpop.f32.mrb[0].mxu0
  %v235 = vadd.f32 %v91, %v234
  %v236 = vpop.f32.mrb[0].mxu0
  %237 = vmatprep.mubr.bf16.mxu0 0
  %238 = vmatmul.mubr.bf16.gmra.mrb[0].mxu0 %v127
  %v239 = vpop.f32.mrb[0].mxu0
  %v240 = vadd.f32 %v91, %v239
  %v241 = vpop.f32.mrb[0].mxu0
  %v242 = vpop.f32.mrb[0].mxu0
  %v243 = vadd.f32 %v91, %v242
  %v244 = vpop.f32.mrb[0].mxu0
  %245 = vmatprep.mubr.bf16.mxu0 0
  %246 = vmatmul.mubr.bf16.gmra.mrb[0].mxu0 %v128
  %v247 = vpop.f32.mrb[0].mxu0
  %v248 = vadd.f32 %v91, %v247
  %v249 = vpop.f32.mrb[0].mxu0
  %v250 = vpop.f32.mrb[0].mxu0
  %v251 = vadd.f32 %v91, %v250
  %v252 = vpop.f32.mrb[0].mxu0
  %253 = vmatprep.mubr.bf16.mxu0 0
  %254 = vmatmul.mubr.bf16.gmra.mrb[0].mxu0 %v129
  %v255 = vpop.f32.mrb[0].mxu0
  %v256 = vadd.f32 %v91, %v255
  %v257 = vpop.f32.mrb[0].mxu0
  %v258 = vpop.f32.mrb[0].mxu0
  %v259 = vadd.f32 %v91, %v258
  %v260 = vpop.f32.mrb[0].mxu0
  %261 = vmatprep.mubr.bf16.mxu0 0
  %262 = vmatmul.mubr.bf16.gmra.mrb[0].mxu0 %v130
  %v263 = vpop.f32.mrb[0].mxu0
  %v264 = vadd.f32 %v91, %v263
  %v265 = vpop.f32.mrb[0].mxu0
  %v266 = vpop.f32.mrb[0].mxu0
  %v267 = vadd.f32 %v91, %v266
  %v268 = vpop.f32.mrb[0].mxu0
  %269 = vmatprep.mubr.bf16.mxu0 0
  %270 = vmatmul.mubr.bf16.gmra.mrb[0].mxu0 %v131
  %v271 = vpop.f32.mrb[0].mxu0
  %v272 = vadd.f32 %v91, %v271
  %v273 = vpop.f32.mrb[0].mxu0
  %v274 = vpop.f32.mrb[0].mxu0
  %v275 = vadd.f32 %v91, %v274
  %v276 = vpop.f32.mrb[0].mxu0
  %277 = vmatprep.mubr.bf16.mxu0 0
  %278 = vmatmul.mubr.bf16.gmra.mrb[0].mxu0 %v132
  %v279 = vpop.f32.mrb[0].mxu0
  %v280 = vadd.f32 %v91, %v279
  %v281 = vpop.f32.mrb[0].mxu0
  %v282 = vpop.f32.mrb[0].mxu0
  %v283 = vadd.f32 %v91, %v282
  %v284 = vpop.f32.mrb[0].mxu0
  %285 = vdwg.mxu0
  %v286 = vmax.f32 %v224, 0.0
  %v287 = vmax.f32 %v227, 0.0
  %v288 = vmax.f32 %v232, 0.0
  %v289 = vmax.f32 %v235, 0.0
  %v290 = vmax.f32 %v240, 0.0
  %v291 = vmax.f32 %v243, 0.0
  %v292 = vmax.f32 %v248, 0.0
  %v293 = vmax.f32 %v251, 0.0
  %v294 = vmax.f32 %v256, 0.0
  %v295 = vmax.f32 %v259, 0.0
  %v296 = vmax.f32 %v264, 0.0
  %v297 = vmax.f32 %v267, 0.0
  %v298 = vmax.f32 %v272, 0.0
  %v299 = vmax.f32 %v275, 0.0
  %v300 = vmax.f32 %v280, 0.0
  %v301 = vmax.f32 %v283, 0.0
  %v302 = vpack.c.bf16 %v287, %v286
  %v303 = vpack.c.bf16 %v289, %v288
  %v304 = vpack.c.bf16 %v291, %v290
  %v305 = vpack.c.bf16 %v293, %v292
  %v306 = vpack.c.bf16 %v295, %v294
  %v307 = vpack.c.bf16 %v297, %v296
  %v308 = vpack.c.bf16 %v299, %v298
  %v309 = vpack.c.bf16 %v301, %v300
  %v310 = vld [vmem:[%s4] sm:$0xff]
  %v311 = vld [vmem:[%s4 + $0x8] sm:$0xf]
  %v312 = vld [vmem:[%s4 + $0xc] sm:$0xff]
  %v313 = vld [vmem:[%s4 + $0x14] sm:$0xf]
  %v314 = vld [vmem:[%s4 + $0x18] sm:$0xff]
  %v315 = vld [vmem:[%s4 + $0x20] sm:$0xf]
  %v316 = vld [vmem:[%s4 + $0x24] sm:$0xff]
  %v317 = vld [vmem:[%s4 + $0x2c] sm:$0xf]
  %v318 = vld [vmem:[%s4 + $0x30] sm:$0xff]
  %v319 = vld [vmem:[%s4 + $0x38] sm:$0xf]
  %v320 = vld [vmem:[%s4 + $0x3c] sm:$0xff]
  %v321 = vld [vmem:[%s4 + $0x44] sm:$0xf]
  %v322 = vld [vmem:[%s4 + $0x48] sm:$0xff]
  %v323 = vld [vmem:[%s4 + $0x50] sm:$0xf]
  %v324 = vld [vmem:[%s4 + $0x54] sm:$0xff]
  %v325 = vld [vmem:[%s4 + $0x5c] sm:$0xf]
  %v326 = vld [vmem:[%s4 + $0x60] sm:$0xff]
  %v327 = vld [vmem:[%s4 + $0x68] sm:$0xf]
  %v328 = vld [vmem:[%s4 + $0x6c] sm:$0xff]
  %v329 = vld [vmem:[%s4 + $0x74] sm:$0xf]
  %v330 = vld [vmem:[%s4 + $0x78] sm:$0xff]
  %v331 = vld [vmem:[%s4 + $0x80] sm:$0xf]
  %v332 = vld [vmem:[%s4 + $0x84] sm:$0xff]
  %v333 = vld [vmem:[%s4 + $0x8c] sm:$0xf]
  %v334 = vld [vmem:[%s4 + $0x90] sm:$0xff]
  %v335 = vld [vmem:[%s4 + $0x98] sm:$0xf]
  %v336 = vld [vmem:[%s4 + $0x9c] sm:$0xff]
  %v337 = vld [vmem:[%s4 + $0xa4] sm:$0xf]
  %v338 = vld [vmem:[%s4 + $0xa8] sm:$0xff]
  %v339 = vld [vmem:[%s4 + $0xb0] sm:$0xf]
  %v340 = vld [vmem:[%s4 + $0xb4] sm:$0xff]
  %v341 = vld [vmem:[%s4 + $0xbc] sm:$0xf]
  %v342 = vld [vmem:[%s5] sm:$0x7]
  %v344 = vlaneseq
  %v345 = vshrl.u32 %v344, 7
  %v346 = vsub.s32 0, %v345
  %v347 = vrot.slane %v342, %v346
  %v348 = vlaneseq
  %v349 = vshrl.u32 %v348, 7
  %v350 = vsub.s32 1, %v349
  %v351 = vrot.slane %v342, %v350
  %v352 = vlaneseq
  %v353 = vshrl.u32 %v352, 7
  %v354 = vsub.s32 2, %v353
  %v355 = vrot.slane %v342, %v354
  %v391 = vunpack.c.l.b16 %v310
  %v392 = vunpack.c.h.b16 %v310
  %v393 = vunpack.c.l.b16 %v311
  %v394 = vunpack.c.l.b16 %v312
  %v395 = vunpack.c.h.b16 %v312
  %v396 = vunpack.c.l.b16 %v313
  %v397 = vunpack.c.l.b16 %v314
  %v398 = vunpack.c.h.b16 %v314
  %v399 = vunpack.c.l.b16 %v315
  %v400 = vunpack.c.l.b16 %v316
  %v401 = vunpack.c.h.b16 %v316
  %v402 = vunpack.c.l.b16 %v317
  %v403 = vunpack.c.l.b16 %v318
  %v404 = vunpack.c.h.b16 %v318
  %v405 = vunpack.c.l.b16 %v319
  %v406 = vunpack.c.l.b16 %v320
  %v407 = vunpack.c.h.b16 %v320
  %v408 = vunpack.c.l.b16 %v321
  %v409 = vunpack.c.l.b16 %v322
  %v410 = vunpack.c.h.b16 %v322
  %v411 = vunpack.c.l.b16 %v323
  %v412 = vunpack.c.l.b16 %v324
  %v413 = vunpack.c.h.b16 %v324
  %v414 = vunpack.c.l.b16 %v325
  %v415 = vunpack.c.l.b16 %v326
  %v416 = vunpack.c.h.b16 %v326
  %v417 = vunpack.c.l.b16 %v327
  %v418 = vunpack.c.l.b16 %v328
  %v419 = vunpack.c.h.b16 %v328
  %v420 = vunpack.c.l.b16 %v329
  %v421 = vunpack.c.l.b16 %v330
  %v422 = vunpack.c.h.b16 %v330
  %v423 = vunpack.c.l.b16 %v331
  %v424 = vunpack.c.l.b16 %v332
  %v425 = vunpack.c.h.b16 %v332
  %v426 = vunpack.c.l.b16 %v333
  %v427 = vunpack.c.l.b16 %v334
  %v428 = vunpack.c.h.b16 %v334
  %v429 = vunpack.c.l.b16 %v335
  %v430 = vunpack.c.l.b16 %v336
  %v431 = vunpack.c.h.b16 %v336
  %v432 = vunpack.c.l.b16 %v337
  %v433 = vunpack.c.l.b16 %v338
  %v434 = vunpack.c.h.b16 %v338
  %v435 = vunpack.c.l.b16 %v339
  %v436 = vunpack.c.l.b16 %v340
  %v437 = vunpack.c.h.b16 %v340
  %v438 = vunpack.c.l.b16 %v341
  %v439 = vpack.c.b16 %v394, %v391
  %v440 = vpack.c.b16 %v395, %v392
  %v441 = vpack.c.b16 %v396, %v393
  %v442 = vpack.c.b16 %v400, %v397
  %v443 = vpack.c.b16 %v401, %v398
  %v444 = vpack.c.b16 %v402, %v399
  %v445 = vpack.c.b16 %v406, %v403
  %v446 = vpack.c.b16 %v407, %v404
  %v447 = vpack.c.b16 %v408, %v405
  %v448 = vpack.c.b16 %v412, %v409
  %v449 = vpack.c.b16 %v413, %v410
  %v450 = vpack.c.b16 %v414, %v411
  %v451 = vpack.c.b16 %v418, %v415
  %v452 = vpack.c.b16 %v419, %v416
  %v453 = vpack.c.b16 %v420, %v417
  %v454 = vpack.c.b16 %v424, %v421
  %v455 = vpack.c.b16 %v425, %v422
  %v456 = vpack.c.b16 %v426, %v423
  %v457 = vpack.c.b16 %v430, %v427
  %v458 = vpack.c.b16 %v431, %v428
  %v459 = vpack.c.b16 %v432, %v429
  %v460 = vpack.c.b16 %v436, %v433
  %v461 = vpack.c.b16 %v437, %v434
  %v462 = vpack.c.b16 %v438, %v435
  %487 = vmatprep.subr.bf16.mxu0 %v440
  %488 = vmatpush1.bf16.msra.mxu0 %v439
  %489 = vmatprep.subr.bf16.mxu0 %v443
  %490 = vmatpush1.bf16.msra.mxu0 %v442
  %491 = vmatprep.subr.bf16.mxu0 %v446
  %492 = vmatpush1.bf16.msra.mxu0 %v445
  %493 = vmatprep.subr.bf16.mxu0 %v449
  %494 = vmatpush1.bf16.msra.mxu0 %v448
  %495 = vmatprep.subr.bf16.mxu0 %v452
  %496 = vmatpush1.bf16.msra.mxu0 %v451
  %497 = vmatprep.subr.bf16.mxu0 %v455
  %498 = vmatpush1.bf16.msra.mxu0 %v454
  %499 = vmatprep.subr.bf16.mxu0 %v458
  %500 = vmatpush1.bf16.msra.mxu0 %v457
  %501 = vmatprep.subr.bf16.mxu0 %v461
  %502 = vmatpush1.bf16.msra.mxu0 %v460
  %503 = vmatprep.subr.bf16.mxu0 0
  %504 = vmatpush1.bf16.msra.mxu0 0
  %505 = vmatprep.subr.bf16.mxu0 0
  %506 = vmatpush1.bf16.msra.mxu0 0
  %507 = vmatprep.subr.bf16.mxu0 0
  %508 = vmatpush1.bf16.msra.mxu0 0
  %509 = vmatprep.subr.bf16.mxu0 0
  %510 = vmatpush1.bf16.msra.mxu0 0
  %511 = vmatprep.subr.bf16.mxu0 0
  %512 = vmatpush1.bf16.msra.mxu0 0
  %513 = vmatprep.subr.bf16.mxu0 0
  %514 = vmatpush1.bf16.msra.mxu0 0
  %515 = vmatprep.subr.bf16.mxu0 0
  %516 = vmatpush1.bf16.msra.mxu0 0
  %517 = vmatprep.subr.bf16.mxu0 0
  %518 = vmatpush1.bf16.msra.mxu0 0
  %519 = vmatprep.mubr.bf16.mxu0 0
  %520 = vmatmul.mubr.bf16.gmra.mrb[0].mxu0 %v302
  %v521 = vpop.f32.mrb[0].mxu0
  %v522 = vadd.f32 %v347, %v521
  %v523 = vpop.f32.mrb[0].mxu0
  %v524 = vadd.f32 %v351, %v523
  %v525 = vpop.f32.mrb[0].mxu0
  %v526 = vadd.f32 %v347, %v525
  %v527 = vpop.f32.mrb[0].mxu0
  %v528 = vadd.f32 %v351, %v527
  %529 = vmatprep.mubr.bf16.mxu0 0
  %530 = vmatmul.mubr.bf16.gmra.mrb[0].mxu0 %v303
  %v531 = vpop.f32.mrb[0].mxu0
  %v532 = vadd.f32 %v347, %v531
  %v533 = vpop.f32.mrb[0].mxu0
  %v534 = vadd.f32 %v351, %v533
  %v535 = vpop.f32.mrb[0].mxu0
  %v536 = vadd.f32 %v347, %v535
  %v537 = vpop.f32.mrb[0].mxu0
  %v538 = vadd.f32 %v351, %v537
  %539 = vmatprep.mubr.bf16.mxu0 0
  %540 = vmatmul.mubr.bf16.gmra.mrb[0].mxu0 %v304
  %v541 = vpop.f32.mrb[0].mxu0
  %v542 = vadd.f32 %v347, %v541
  %v543 = vpop.f32.mrb[0].mxu0
  %v544 = vadd.f32 %v351, %v543
  %v545 = vpop.f32.mrb[0].mxu0
  %v546 = vadd.f32 %v347, %v545
  %v547 = vpop.f32.mrb[0].mxu0
  %v548 = vadd.f32 %v351, %v547
  %549 = vmatprep.mubr.bf16.mxu0 0
  %550 = vmatmul.mubr.bf16.gmra.mrb[0].mxu0 %v305
  %v551 = vpop.f32.mrb[0].mxu0
  %v552 = vadd.f32 %v347, %v551
  %v553 = vpop.f32.mrb[0].mxu0
  %v554 = vadd.f32 %v351, %v553
  %v555 = vpop.f32.mrb[0].mxu0
  %v556 = vadd.f32 %v347, %v555
  %v557 = vpop.f32.mrb[0].mxu0
  %v558 = vadd.f32 %v351, %v557
  %559 = vmatprep.mubr.bf16.mxu0 0
  %560 = vmatmul.mubr.bf16.gmra.mrb[0].mxu0 %v306
  %v561 = vpop.f32.mrb[0].mxu0
  %v562 = vadd.f32 %v347, %v561
  %v563 = vpop.f32.mrb[0].mxu0
  %v564 = vadd.f32 %v351, %v563
  %v565 = vpop.f32.mrb[0].mxu0
  %v566 = vadd.f32 %v347, %v565
  %v567 = vpop.f32.mrb[0].mxu0
  %v568 = vadd.f32 %v351, %v567
  %569 = vmatprep.mubr.bf16.mxu0 0
  %570 = vmatmul.mubr.bf16.gmra.mrb[0].mxu0 %v307
  %v571 = vpop.f32.mrb[0].mxu0
  %v572 = vadd.f32 %v347, %v571
  %v573 = vpop.f32.mrb[0].mxu0
  %v574 = vadd.f32 %v351, %v573
  %v575 = vpop.f32.mrb[0].mxu0
  %v576 = vadd.f32 %v347, %v575
  %v577 = vpop.f32.mrb[0].mxu0
  %v578 = vadd.f32 %v351, %v577
  %579 = vmatprep.mubr.bf16.mxu0 0
  %580 = vmatmul.mubr.bf16.gmra.mrb[0].mxu0 %v308
  %v581 = vpop.f32.mrb[0].mxu0
  %v582 = vadd.f32 %v347, %v581
  %v583 = vpop.f32.mrb[0].mxu0
  %v584 = vadd.f32 %v351, %v583
  %v585 = vpop.f32.mrb[0].mxu0
  %v586 = vadd.f32 %v347, %v585
  %v587 = vpop.f32.mrb[0].mxu0
  %v588 = vadd.f32 %v351, %v587
  %589 = vmatprep.mubr.bf16.mxu0 0
  %590 = vmatmul.mubr.bf16.gmra.mrb[0].mxu0 %v309
  %v591 = vpop.f32.mrb[0].mxu0
  %v592 = vadd.f32 %v347, %v591
  %v593 = vpop.f32.mrb[0].mxu0
  %v594 = vadd.f32 %v351, %v593
  %v595 = vpop.f32.mrb[0].mxu0
  %v596 = vadd.f32 %v347, %v595
  %v597 = vpop.f32.mrb[0].mxu0
  %v598 = vadd.f32 %v351, %v597
  %599 = vdwg.mxu0
  %600 = vmatprep.subr.bf16.mxu0 0
  %601 = vmatpush1.bf16.msra.mxu0 %v441
  %602 = vmatprep.subr.bf16.mxu0 0
  %603 = vmatpush1.bf16.msra.mxu0 %v444
  %604 = vmatprep.subr.bf16.mxu0 0
  %605 = vmatpush1.bf16.msra.mxu0 %v447
  %606 = vmatprep.subr.bf16.mxu0 0
  %607 = vmatpush1.bf16.msra.mxu0 %v450
  %608 = vmatprep.subr.bf16.mxu0 0
  %609 = vmatpush1.bf16.msra.mxu0 %v453
  %610 = vmatprep.subr.bf16.mxu0 0
  %611 = vmatpush1.bf16.msra.mxu0 %v456
  %612 = vmatprep.subr.bf16.mxu0 0
  %613 = vmatpush1.bf16.msra.mxu0 %v459
  %614 = vmatprep.subr.bf16.mxu0 0
  %615 = vmatpush1.bf16.msra.mxu0 %v462
  %616 = vmatprep.subr.bf16.mxu0 0
  %617 = vmatpush1.bf16.msra.mxu0 0
  %618 = vmatprep.subr.bf16.mxu0 0
  %619 = vmatpush1.bf16.msra.mxu0 0
  %620 = vmatprep.subr.bf16.mxu0 0
  %621 = vmatpush1.bf16.msra.mxu0 0
  %622 = vmatprep.subr.bf16.mxu0 0
  %623 = vmatpush1.bf16.msra.mxu0 0
  %624 = vmatprep.subr.bf16.mxu0 0
  %625 = vmatpush1.bf16.msra.mxu0 0
  %626 = vmatprep.subr.bf16.mxu0 0
  %627 = vmatpush1.bf16.msra.mxu0 0
  %628 = vmatprep.subr.bf16.mxu0 0
  %629 = vmatpush1.bf16.msra.mxu0 0
  %630 = vmatprep.subr.bf16.mxu0 0
  %631 = vmatpush1.bf16.msra.mxu0 0
  %632 = vmatprep.mubr.bf16.mxu0 0
  %633 = vmatmul.mubr.bf16.gmra.mrb[0].mxu0 %v302
  %v634 = vpop.f32.mrb[0].mxu0
  %v635 = vadd.f32 %v355, %v634
  %v636 = vpop.f32.mrb[0].mxu0
  %v637 = vpop.f32.mrb[0].mxu0
  %v638 = vadd.f32 %v355, %v637
  %v639 = vpop.f32.mrb[0].mxu0
  %640 = vmatprep.mubr.bf16.mxu0 0
  %641 = vmatmul.mubr.bf16.gmra.mrb[0].mxu0 %v303
  %v642 = vpop.f32.mrb[0].mxu0
  %v643 = vadd.f32 %v355, %v642
  %v644 = vpop.f32.mrb[0].mxu0
  %v645 = vpop.f32.mrb[0].mxu0
  %v646 = vadd.f32 %v355, %v645
  %v647 = vpop.f32.mrb[0].mxu0
  %648 = vmatprep.mubr.bf16.mxu0 0
  %649 = vmatmul.mubr.bf16.gmra.mrb[0].mxu0 %v304
  %v650 = vpop.f32.mrb[0].mxu0
  %v651 = vadd.f32 %v355, %v650
  %v652 = vpop.f32.mrb[0].mxu0
  %v653 = vpop.f32.mrb[0].mxu0
  %v654 = vadd.f32 %v355, %v653
  %v655 = vpop.f32.mrb[0].mxu0
  %656 = vmatprep.mubr.bf16.mxu0 0
  %657 = vmatmul.mubr.bf16.gmra.mrb[0].mxu0 %v305
  %v658 = vpop.f32.mrb[0].mxu0
  %v659 = vadd.f32 %v355, %v658
  %v660 = vpop.f32.mrb[0].mxu0
  %v661 = vpop.f32.mrb[0].mxu0
  %v662 = vadd.f32 %v355, %v661
  %v663 = vpop.f32.mrb[0].mxu0
  %664 = vmatprep.mubr.bf16.mxu0 0
  %665 = vmatmul.mubr.bf16.gmra.mrb[0].mxu0 %v306
  %v666 = vpop.f32.mrb[0].mxu0
  %v667 = vadd.f32 %v355, %v666
  %v668 = vpop.f32.mrb[0].mxu0
  %v669 = vpop.f32.mrb[0].mxu0
  %v670 = vadd.f32 %v355, %v669
  %v671 = vpop.f32.mrb[0].mxu0
  %672 = vmatprep.mubr.bf16.mxu0 0
  %673 = vmatmul.mubr.bf16.gmra.mrb[0].mxu0 %v307
  %v674 = vpop.f32.mrb[0].mxu0
  %v675 = vadd.f32 %v355, %v674
  %v676 = vpop.f32.mrb[0].mxu0
  %v677 = vpop.f32.mrb[0].mxu0
  %v678 = vadd.f32 %v355, %v677
  %v679 = vpop.f32.mrb[0].mxu0
  %680 = vmatprep.mubr.bf16.mxu0 0
  %681 = vmatmul.mubr.bf16.gmra.mrb[0].mxu0 %v308
  %v682 = vpop.f32.mrb[0].mxu0
  %v683 = vadd.f32 %v355, %v682
  %v684 = vpop.f32.mrb[0].mxu0
  %v685 = vpop.f32.mrb[0].mxu0
  %v686 = vadd.f32 %v355, %v685
  %v687 = vpop.f32.mrb[0].mxu0
  %688 = vmatprep.mubr.bf16.mxu0 0
  %689 = vmatmul.mubr.bf16.gmra.mrb[0].mxu0 %v309
  %v690 = vpop.f32.mrb[0].mxu0
  %v691 = vadd.f32 %v355, %v690
  %v692 = vpop.f32.mrb[0].mxu0
  %v693 = vpop.f32.mrb[0].mxu0
  %v694 = vadd.f32 %v355, %v693
  %v695 = vpop.f32.mrb[0].mxu0
  %696 = vdwg.mxu0
  %v697 = vpack.c.bf16 %v55, %v54
  %v698 = vpack.c.bf16 %v57, %v56
  %v699 = vpack.c.bf16 %v59, %v58
  %v700 = vpack.c.bf16 %v61, %v60
  %v701 = vpack.c.bf16 %v63, %v62
  %v702 = vpack.c.bf16 %v65, %v64
  %v703 = vpack.c.bf16 %v67, %v66
  %v704 = vpack.c.bf16 %v69, %v68
  %v705 = vld [vmem:[%s6] sm:$0xff]
  %v706 = vld [vmem:[%s6 + $0x8] sm:$0xf]
  %v707 = vld [vmem:[%s6 + $0xc] sm:$0xff]
  %v708 = vld [vmem:[%s6 + $0x14] sm:$0xf]
  %v709 = vld [vmem:[%s6 + $0x18] sm:$0xff]
  %v710 = vld [vmem:[%s6 + $0x20] sm:$0xf]
  %v711 = vld [vmem:[%s6 + $0x24] sm:$0xff]
  %v712 = vld [vmem:[%s6 + $0x2c] sm:$0xf]
  %v713 = vld [vmem:[%s6 + $0x30] sm:$0xff]
  %v714 = vld [vmem:[%s6 + $0x38] sm:$0xf]
  %v715 = vld [vmem:[%s6 + $0x3c] sm:$0xff]
  %v716 = vld [vmem:[%s6 + $0x44] sm:$0xf]
  %v717 = vld [vmem:[%s6 + $0x48] sm:$0xff]
  %v718 = vld [vmem:[%s6 + $0x50] sm:$0xf]
  %v719 = vld [vmem:[%s6 + $0x54] sm:$0xff]
  %v720 = vld [vmem:[%s6 + $0x5c] sm:$0xf]
  %v721 = vld [vmem:[%s6 + $0x60] sm:$0xff]
  %v722 = vld [vmem:[%s6 + $0x68] sm:$0xf]
  %v723 = vld [vmem:[%s6 + $0x6c] sm:$0xff]
  %v724 = vld [vmem:[%s6 + $0x74] sm:$0xf]
  %v725 = vld [vmem:[%s6 + $0x78] sm:$0xff]
  %v726 = vld [vmem:[%s6 + $0x80] sm:$0xf]
  %v727 = vld [vmem:[%s6 + $0x84] sm:$0xff]
  %v728 = vld [vmem:[%s6 + $0x8c] sm:$0xf]
  %v729 = vld [vmem:[%s6 + $0x90] sm:$0xff]
  %v730 = vld [vmem:[%s6 + $0x98] sm:$0xf]
  %v731 = vld [vmem:[%s6 + $0x9c] sm:$0xff]
  %v732 = vld [vmem:[%s6 + $0xa4] sm:$0xf]
  %v733 = vld [vmem:[%s6 + $0xa8] sm:$0xff]
  %v734 = vld [vmem:[%s6 + $0xb0] sm:$0xf]
  %v735 = vld [vmem:[%s6 + $0xb4] sm:$0xff]
  %v736 = vld [vmem:[%s6 + $0xbc] sm:$0xf]
  %v737 = vld [vmem:[%s7] sm:$0x7]
  %v739 = vlaneseq
  %v740 = vshrl.u32 %v739, 7
  %v741 = vsub.s32 0, %v740
  %v742 = vrot.slane %v737, %v741
  %v743 = vlaneseq
  %v744 = vshrl.u32 %v743, 7
  %v745 = vsub.s32 1, %v744
  %v746 = vrot.slane %v737, %v745
  %v747 = vlaneseq
  %v748 = vshrl.u32 %v747, 7
  %v749 = vsub.s32 2, %v748
  %v750 = vrot.slane %v737, %v749
  %v786 = vunpack.c.l.b16 %v705
  %v787 = vunpack.c.h.b16 %v705
  %v788 = vunpack.c.l.b16 %v706
  %v789 = vunpack.c.l.b16 %v707
  %v790 = vunpack.c.h.b16 %v707
  %v791 = vunpack.c.l.b16 %v708
  %v792 = vunpack.c.l.b16 %v709
  %v793 = vunpack.c.h.b16 %v709
  %v794 = vunpack.c.l.b16 %v710
  %v795 = vunpack.c.l.b16 %v711
  %v796 = vunpack.c.h.b16 %v711
  %v797 = vunpack.c.l.b16 %v712
  %v798 = vunpack.c.l.b16 %v713
  %v799 = vunpack.c.h.b16 %v713
  %v800 = vunpack.c.l.b16 %v714
  %v801 = vunpack.c.l.b16 %v715
  %v802 = vunpack.c.h.b16 %v715
  %v803 = vunpack.c.l.b16 %v716
  %v804 = vunpack.c.l.b16 %v717
  %v805 = vunpack.c.h.b16 %v717
  %v806 = vunpack.c.l.b16 %v718
  %v807 = vunpack.c.l.b16 %v719
  %v808 = vunpack.c.h.b16 %v719
  %v809 = vunpack.c.l.b16 %v720
  %v810 = vunpack.c.l.b16 %v721
  %v811 = vunpack.c.h.b16 %v721
  %v812 = vunpack.c.l.b16 %v722
  %v813 = vunpack.c.l.b16 %v723
  %v814 = vunpack.c.h.b16 %v723
  %v815 = vunpack.c.l.b16 %v724
  %v816 = vunpack.c.l.b16 %v725
  %v817 = vunpack.c.h.b16 %v725
  %v818 = vunpack.c.l.b16 %v726
  %v819 = vunpack.c.l.b16 %v727
  %v820 = vunpack.c.h.b16 %v727
  %v821 = vunpack.c.l.b16 %v728
  %v822 = vunpack.c.l.b16 %v729
  %v823 = vunpack.c.h.b16 %v729
  %v824 = vunpack.c.l.b16 %v730
  %v825 = vunpack.c.l.b16 %v731
  %v826 = vunpack.c.h.b16 %v731
  %v827 = vunpack.c.l.b16 %v732
  %v828 = vunpack.c.l.b16 %v733
  %v829 = vunpack.c.h.b16 %v733
  %v830 = vunpack.c.l.b16 %v734
  %v831 = vunpack.c.l.b16 %v735
  %v832 = vunpack.c.h.b16 %v735
  %v833 = vunpack.c.l.b16 %v736
  %v834 = vpack.c.b16 %v789, %v786
  %v835 = vpack.c.b16 %v790, %v787
  %v836 = vpack.c.b16 %v791, %v788
  %v837 = vpack.c.b16 %v795, %v792
  %v838 = vpack.c.b16 %v796, %v793
  %v839 = vpack.c.b16 %v797, %v794
  %v840 = vpack.c.b16 %v801, %v798
  %v841 = vpack.c.b16 %v802, %v799
  %v842 = vpack.c.b16 %v803, %v800
  %v843 = vpack.c.b16 %v807, %v804
  %v844 = vpack.c.b16 %v808, %v805
  %v845 = vpack.c.b16 %v809, %v806
  %v846 = vpack.c.b16 %v813, %v810
  %v847 = vpack.c.b16 %v814, %v811
  %v848 = vpack.c.b16 %v815, %v812
  %v849 = vpack.c.b16 %v819, %v816
  %v850 = vpack.c.b16 %v820, %v817
  %v851 = vpack.c.b16 %v821, %v818
  %v852 = vpack.c.b16 %v825, %v822
  %v853 = vpack.c.b16 %v826, %v823
  %v854 = vpack.c.b16 %v827, %v824
  %v855 = vpack.c.b16 %v831, %v828
  %v856 = vpack.c.b16 %v832, %v829
  %v857 = vpack.c.b16 %v833, %v830
  %882 = vmatprep.subr.bf16.mxu0 %v835
  %883 = vmatpush1.bf16.msra.mxu0 %v834
  %884 = vmatprep.subr.bf16.mxu0 %v838
  %885 = vmatpush1.bf16.msra.mxu0 %v837
  %886 = vmatprep.subr.bf16.mxu0 %v841
  %887 = vmatpush1.bf16.msra.mxu0 %v840
  %888 = vmatprep.subr.bf16.mxu0 %v844
  %889 = vmatpush1.bf16.msra.mxu0 %v843
  %890 = vmatprep.subr.bf16.mxu0 %v847
  %891 = vmatpush1.bf16.msra.mxu0 %v846
  %892 = vmatprep.subr.bf16.mxu0 %v850
  %893 = vmatpush1.bf16.msra.mxu0 %v849
  %894 = vmatprep.subr.bf16.mxu0 %v853
  %895 = vmatpush1.bf16.msra.mxu0 %v852
  %896 = vmatprep.subr.bf16.mxu0 %v856
  %897 = vmatpush1.bf16.msra.mxu0 %v855
  %898 = vmatprep.subr.bf16.mxu0 0
  %899 = vmatpush1.bf16.msra.mxu0 0
  %900 = vmatprep.subr.bf16.mxu0 0
  %901 = vmatpush1.bf16.msra.mxu0 0
  %902 = vmatprep.subr.bf16.mxu0 0
  %903 = vmatpush1.bf16.msra.mxu0 0
  %904 = vmatprep.subr.bf16.mxu0 0
  %905 = vmatpush1.bf16.msra.mxu0 0
  %906 = vmatprep.subr.bf16.mxu0 0
  %907 = vmatpush1.bf16.msra.mxu0 0
  %908 = vmatprep.subr.bf16.mxu0 0
  %909 = vmatpush1.bf16.msra.mxu0 0
  %910 = vmatprep.subr.bf16.mxu0 0
  %911 = vmatpush1.bf16.msra.mxu0 0
  %912 = vmatprep.subr.bf16.mxu0 0
  %913 = vmatpush1.bf16.msra.mxu0 0
  %914 = vmatprep.mubr.bf16.mxu0 0
  %915 = vmatmul.mubr.bf16.gmra.mrb[0].mxu0 %v697
  %v916 = vpop.f32.mrb[0].mxu0
  %v917 = vadd.f32 %v742, %v916
  %v918 = vpop.f32.mrb[0].mxu0
  %v919 = vadd.f32 %v746, %v918
  %v920 = vpop.f32.mrb[0].mxu0
  %v921 = vadd.f32 %v742, %v920
  %v922 = vpop.f32.mrb[0].mxu0
  %v923 = vadd.f32 %v746, %v922
  %924 = vmatprep.mubr.bf16.mxu0 0
  %925 = vmatmul.mubr.bf16.gmra.mrb[0].mxu0 %v698
  %v926 = vpop.f32.mrb[0].mxu0
  %v927 = vadd.f32 %v742, %v926
  %v928 = vpop.f32.mrb[0].mxu0
  %v929 = vadd.f32 %v746, %v928
  %v930 = vpop.f32.mrb[0].mxu0
  %v931 = vadd.f32 %v742, %v930
  %v932 = vpop.f32.mrb[0].mxu0
  %v933 = vadd.f32 %v746, %v932
  %934 = vmatprep.mubr.bf16.mxu0 0
  %935 = vmatmul.mubr.bf16.gmra.mrb[0].mxu0 %v699
  %v936 = vpop.f32.mrb[0].mxu0
  %v937 = vadd.f32 %v742, %v936
  %v938 = vpop.f32.mrb[0].mxu0
  %v939 = vadd.f32 %v746, %v938
  %v940 = vpop.f32.mrb[0].mxu0
  %v941 = vadd.f32 %v742, %v940
  %v942 = vpop.f32.mrb[0].mxu0
  %v943 = vadd.f32 %v746, %v942
  %944 = vmatprep.mubr.bf16.mxu0 0
  %945 = vmatmul.mubr.bf16.gmra.mrb[0].mxu0 %v700
  %v946 = vpop.f32.mrb[0].mxu0
  %v947 = vadd.f32 %v742, %v946
  %v948 = vpop.f32.mrb[0].mxu0
  %v949 = vadd.f32 %v746, %v948
  %v950 = vpop.f32.mrb[0].mxu0
  %v951 = vadd.f32 %v742, %v950
  %v952 = vpop.f32.mrb[0].mxu0
  %v953 = vadd.f32 %v746, %v952
  %954 = vmatprep.mubr.bf16.mxu0 0
  %955 = vmatmul.mubr.bf16.gmra.mrb[0].mxu0 %v701
  %v956 = vpop.f32.mrb[0].mxu0
  %v957 = vadd.f32 %v742, %v956
  %v958 = vpop.f32.mrb[0].mxu0
  %v959 = vadd.f32 %v746, %v958
  %v960 = vpop.f32.mrb[0].mxu0
  %v961 = vadd.f32 %v742, %v960
  %v962 = vpop.f32.mrb[0].mxu0
  %v963 = vadd.f32 %v746, %v962
  %964 = vmatprep.mubr.bf16.mxu0 0
  %965 = vmatmul.mubr.bf16.gmra.mrb[0].mxu0 %v702
  %v966 = vpop.f32.mrb[0].mxu0
  %v967 = vadd.f32 %v742, %v966
  %v968 = vpop.f32.mrb[0].mxu0
  %v969 = vadd.f32 %v746, %v968
  %v970 = vpop.f32.mrb[0].mxu0
  %v971 = vadd.f32 %v742, %v970
  %v972 = vpop.f32.mrb[0].mxu0
  %v973 = vadd.f32 %v746, %v972
  %974 = vmatprep.mubr.bf16.mxu0 0
  %975 = vmatmul.mubr.bf16.gmra.mrb[0].mxu0 %v703
  %v976 = vpop.f32.mrb[0].mxu0
  %v977 = vadd.f32 %v742, %v976
  %v978 = vpop.f32.mrb[0].mxu0
  %v979 = vadd.f32 %v746, %v978
  %v980 = vpop.f32.mrb[0].mxu0
  %v981 = vadd.f32 %v742, %v980
  %v982 = vpop.f32.mrb[0].mxu0
  %v983 = vadd.f32 %v746, %v982
  %984 = vmatprep.mubr.bf16.mxu0 0
  %985 = vmatmul.mubr.bf16.gmra.mrb[0].mxu0 %v704
  %v986 = vpop.f32.mrb[0].mxu0
  %v987 = vadd.f32 %v742, %v986
  %v988 = vpop.f32.mrb[0].mxu0
  %v989 = vadd.f32 %v746, %v988
  %v990 = vpop.f32.mrb[0].mxu0
  %v991 = vadd.f32 %v742, %v990
  %v992 = vpop.f32.mrb[0].mxu0
  %v993 = vadd.f32 %v746, %v992
  %994 = vdwg.mxu0
  %995 = vmatprep.subr.bf16.mxu0 0
  %996 = vmatpush1.bf16.msra.mxu0 %v836
  %997 = vmatprep.subr.bf16.mxu0 0
  %998 = vmatpush1.bf16.msra.mxu0 %v839
  %999 = vmatprep.subr.bf16.mxu0 0
  %1000 = vmatpush1.bf16.msra.mxu0 %v842
  %1001 = vmatprep.subr.bf16.mxu0 0
  %1002 = vmatpush1.bf16.msra.mxu0 %v845
  %1003 = vmatprep.subr.bf16.mxu0 0
  %1004 = vmatpush1.bf16.msra.mxu0 %v848
  %1005 = vmatprep.subr.bf16.mxu0 0
  %1006 = vmatpush1.bf16.msra.mxu0 %v851
  %1007 = vmatprep.subr.bf16.mxu0 0
  %1008 = vmatpush1.bf16.msra.mxu0 %v854
  %1009 = vmatprep.subr.bf16.mxu0 0
  %1010 = vmatpush1.bf16.msra.mxu0 %v857
  %1011 = vmatprep.subr.bf16.mxu0 0
  %1012 = vmatpush1.bf16.msra.mxu0 0
  %1013 = vmatprep.subr.bf16.mxu0 0
  %1014 = vmatpush1.bf16.msra.mxu0 0
  %1015 = vmatprep.subr.bf16.mxu0 0
  %1016 = vmatpush1.bf16.msra.mxu0 0
  %1017 = vmatprep.subr.bf16.mxu0 0
  %1018 = vmatpush1.bf16.msra.mxu0 0
  %1019 = vmatprep.subr.bf16.mxu0 0
  %1020 = vmatpush1.bf16.msra.mxu0 0
  %1021 = vmatprep.subr.bf16.mxu0 0
  %1022 = vmatpush1.bf16.msra.mxu0 0
  %1023 = vmatprep.subr.bf16.mxu0 0
  %1024 = vmatpush1.bf16.msra.mxu0 0
  %1025 = vmatprep.subr.bf16.mxu0 0
  %1026 = vmatpush1.bf16.msra.mxu0 0
  %1027 = vmatprep.mubr.bf16.mxu0 0
  %1028 = vmatmul.mubr.bf16.gmra.mrb[0].mxu0 %v697
  %v1029 = vpop.f32.mrb[0].mxu0
  %v1030 = vadd.f32 %v750, %v1029
  %v1031 = vpop.f32.mrb[0].mxu0
  %v1032 = vpop.f32.mrb[0].mxu0
  %v1033 = vadd.f32 %v750, %v1032
  %v1034 = vpop.f32.mrb[0].mxu0
  %1035 = vmatprep.mubr.bf16.mxu0 0
  %1036 = vmatmul.mubr.bf16.gmra.mrb[0].mxu0 %v698
  %v1037 = vpop.f32.mrb[0].mxu0
  %v1038 = vadd.f32 %v750, %v1037
  %v1039 = vpop.f32.mrb[0].mxu0
  %v1040 = vpop.f32.mrb[0].mxu0
  %v1041 = vadd.f32 %v750, %v1040
  %v1042 = vpop.f32.mrb[0].mxu0
  %1043 = vmatprep.mubr.bf16.mxu0 0
  %1044 = vmatmul.mubr.bf16.gmra.mrb[0].mxu0 %v699
  %v1045 = vpop.f32.mrb[0].mxu0
  %v1046 = vadd.f32 %v750, %v1045
  %v1047 = vpop.f32.mrb[0].mxu0
  %v1048 = vpop.f32.mrb[0].mxu0
  %v1049 = vadd.f32 %v750, %v1048
  %v1050 = vpop.f32.mrb[0].mxu0
  %1051 = vmatprep.mubr.bf16.mxu0 0
  %1052 = vmatmul.mubr.bf16.gmra.mrb[0].mxu0 %v700
  %v1053 = vpop.f32.mrb[0].mxu0
  %v1054 = vadd.f32 %v750, %v1053
  %v1055 = vpop.f32.mrb[0].mxu0
  %v1056 = vpop.f32.mrb[0].mxu0
  %v1057 = vadd.f32 %v750, %v1056
  %v1058 = vpop.f32.mrb[0].mxu0
  %1059 = vmatprep.mubr.bf16.mxu0 0
  %1060 = vmatmul.mubr.bf16.gmra.mrb[0].mxu0 %v701
  %v1061 = vpop.f32.mrb[0].mxu0
  %v1062 = vadd.f32 %v750, %v1061
  %v1063 = vpop.f32.mrb[0].mxu0
  %v1064 = vpop.f32.mrb[0].mxu0
  %v1065 = vadd.f32 %v750, %v1064
  %v1066 = vpop.f32.mrb[0].mxu0
  %1067 = vmatprep.mubr.bf16.mxu0 0
  %1068 = vmatmul.mubr.bf16.gmra.mrb[0].mxu0 %v702
  %v1069 = vpop.f32.mrb[0].mxu0
  %v1070 = vadd.f32 %v750, %v1069
  %v1071 = vpop.f32.mrb[0].mxu0
  %v1072 = vpop.f32.mrb[0].mxu0
  %v1073 = vadd.f32 %v750, %v1072
  %v1074 = vpop.f32.mrb[0].mxu0
  %1075 = vmatprep.mubr.bf16.mxu0 0
  %1076 = vmatmul.mubr.bf16.gmra.mrb[0].mxu0 %v703
  %v1077 = vpop.f32.mrb[0].mxu0
  %v1078 = vadd.f32 %v750, %v1077
  %v1079 = vpop.f32.mrb[0].mxu0
  %v1080 = vpop.f32.mrb[0].mxu0
  %v1081 = vadd.f32 %v750, %v1080
  %v1082 = vpop.f32.mrb[0].mxu0
  %1083 = vmatprep.mubr.bf16.mxu0 0
  %1084 = vmatmul.mubr.bf16.gmra.mrb[0].mxu0 %v704
  %v1085 = vpop.f32.mrb[0].mxu0
  %v1086 = vadd.f32 %v750, %v1085
  %v1087 = vpop.f32.mrb[0].mxu0
  %v1088 = vpop.f32.mrb[0].mxu0
  %v1089 = vadd.f32 %v750, %v1088
  %v1090 = vpop.f32.mrb[0].mxu0
  %1091 = vdwg.mxu0
  %v1092 = vadd.f32 %v522, %v917
  %v1093 = vadd.f32 %v526, %v921
  %v1094 = vadd.f32 %v532, %v927
  %v1095 = vadd.f32 %v536, %v931
  %v1096 = vadd.f32 %v542, %v937
  %v1097 = vadd.f32 %v546, %v941
  %v1098 = vadd.f32 %v552, %v947
  %v1099 = vadd.f32 %v556, %v951
  %v1100 = vadd.f32 %v562, %v957
  %v1101 = vadd.f32 %v566, %v961
  %v1102 = vadd.f32 %v572, %v967
  %v1103 = vadd.f32 %v576, %v971
  %v1104 = vadd.f32 %v582, %v977
  %v1105 = vadd.f32 %v586, %v981
  %v1106 = vadd.f32 %v592, %v987
  %v1107 = vadd.f32 %v596, %v991
  %v1108 = vxor.u32 %v1092, 2147483648
  %v1109 = vxor.u32 %v1093, 2147483648
  %v1110 = vxor.u32 %v1094, 2147483648
  %v1111 = vxor.u32 %v1095, 2147483648
  %v1112 = vxor.u32 %v1096, 2147483648
  %v1113 = vxor.u32 %v1097, 2147483648
  %v1114 = vxor.u32 %v1098, 2147483648
  %v1115 = vxor.u32 %v1099, 2147483648
  %v1116 = vxor.u32 %v1100, 2147483648
  %v1117 = vxor.u32 %v1101, 2147483648
  %v1118 = vxor.u32 %v1102, 2147483648
  %v1119 = vxor.u32 %v1103, 2147483648
  %v1120 = vxor.u32 %v1104, 2147483648
  %v1121 = vxor.u32 %v1105, 2147483648
  %v1122 = vxor.u32 %v1106, 2147483648
  %v1123 = vxor.u32 %v1107, 2147483648
  %v1124 = vmul.f32 %v1108, 1.442695
  %v1125 = vpow.pop %v1124
  %v1126 = vmul.f32 %v1109, 1.442695
  %v1127 = vpow.pop %v1126
  %v1128 = vmul.f32 %v1110, 1.442695
  %v1129 = vpow.pop %v1128
  %v1130 = vmul.f32 %v1111, 1.442695
  %v1131 = vpow.pop %v1130
  %v1132 = vmul.f32 %v1112, 1.442695
  %v1133 = vpow.pop %v1132
  %v1134 = vmul.f32 %v1113, 1.442695
  %v1135 = vpow.pop %v1134
  %v1136 = vmul.f32 %v1114, 1.442695
  %v1137 = vpow.pop %v1136
  %v1138 = vmul.f32 %v1115, 1.442695
  %v1139 = vpow.pop %v1138
  %v1140 = vmul.f32 %v1116, 1.442695
  %v1141 = vpow.pop %v1140
  %v1142 = vmul.f32 %v1117, 1.442695
  %v1143 = vpow.pop %v1142
  %v1144 = vmul.f32 %v1118, 1.442695
  %v1145 = vpow.pop %v1144
  %v1146 = vmul.f32 %v1119, 1.442695
  %v1147 = vpow.pop %v1146
  %v1148 = vmul.f32 %v1120, 1.442695
  %v1149 = vpow.pop %v1148
  %v1150 = vmul.f32 %v1121, 1.442695
  %v1151 = vpow.pop %v1150
  %v1152 = vmul.f32 %v1122, 1.442695
  %v1153 = vpow.pop %v1152
  %v1154 = vmul.f32 %v1123, 1.442695
  %v1155 = vpow.pop %v1154
  %v1156 = vadd.f32 %v1125, 1.0
  %v1157 = vadd.f32 %v1127, 1.0
  %v1158 = vadd.f32 %v1129, 1.0
  %v1159 = vadd.f32 %v1131, 1.0
  %v1160 = vadd.f32 %v1133, 1.0
  %v1161 = vadd.f32 %v1135, 1.0
  %v1162 = vadd.f32 %v1137, 1.0
  %v1163 = vadd.f32 %v1139, 1.0
  %v1164 = vadd.f32 %v1141, 1.0
  %v1165 = vadd.f32 %v1143, 1.0
  %v1166 = vadd.f32 %v1145, 1.0
  %v1167 = vadd.f32 %v1147, 1.0
  %v1168 = vadd.f32 %v1149, 1.0
  %v1169 = vadd.f32 %v1151, 1.0
  %v1170 = vadd.f32 %v1153, 1.0
  %v1171 = vadd.f32 %v1155, 1.0
  %v1172 = vrcp.pop %v1156
  %v1173 = vmul.f32 1.0, %v1172
  %v1174 = vrcp.pop %v1157
  %v1175 = vmul.f32 1.0, %v1174
  %v1176 = vrcp.pop %v1158
  %v1177 = vmul.f32 1.0, %v1176
  %v1178 = vrcp.pop %v1159
  %v1179 = vmul.f32 1.0, %v1178
  %v1180 = vrcp.pop %v1160
  %v1181 = vmul.f32 1.0, %v1180
  %v1182 = vrcp.pop %v1161
  %v1183 = vmul.f32 1.0, %v1182
  %v1184 = vrcp.pop %v1162
  %v1185 = vmul.f32 1.0, %v1184
  %v1186 = vrcp.pop %v1163
  %v1187 = vmul.f32 1.0, %v1186
  %v1188 = vrcp.pop %v1164
  %v1189 = vmul.f32 1.0, %v1188
  %v1190 = vrcp.pop %v1165
  %v1191 = vmul.f32 1.0, %v1190
  %v1192 = vrcp.pop %v1166
  %v1193 = vmul.f32 1.0, %v1192
  %v1194 = vrcp.pop %v1167
  %v1195 = vmul.f32 1.0, %v1194
  %v1196 = vrcp.pop %v1168
  %v1197 = vmul.f32 1.0, %v1196
  %v1198 = vrcp.pop %v1169
  %v1199 = vmul.f32 1.0, %v1198
  %v1200 = vrcp.pop %v1170
  %v1201 = vmul.f32 1.0, %v1200
  %v1202 = vrcp.pop %v1171
  %v1203 = vmul.f32 1.0, %v1202
  %v1204 = vadd.f32 %v524, %v919
  %v1205 = vadd.f32 %v528, %v923
  %v1206 = vadd.f32 %v534, %v929
  %v1207 = vadd.f32 %v538, %v933
  %v1208 = vadd.f32 %v544, %v939
  %v1209 = vadd.f32 %v548, %v943
  %v1210 = vadd.f32 %v554, %v949
  %v1211 = vadd.f32 %v558, %v953
  %v1212 = vadd.f32 %v564, %v959
  %v1213 = vadd.f32 %v568, %v963
  %v1214 = vadd.f32 %v574, %v969
  %v1215 = vadd.f32 %v578, %v973
  %v1216 = vadd.f32 %v584, %v979
  %v1217 = vadd.f32 %v588, %v983
  %v1218 = vadd.f32 %v594, %v989
  %v1219 = vadd.f32 %v598, %v993
  %v1220 = vxor.u32 %v1204, 2147483648
  %v1221 = vxor.u32 %v1205, 2147483648
  %v1222 = vxor.u32 %v1206, 2147483648
  %v1223 = vxor.u32 %v1207, 2147483648
  %v1224 = vxor.u32 %v1208, 2147483648
  %v1225 = vxor.u32 %v1209, 2147483648
  %v1226 = vxor.u32 %v1210, 2147483648
  %v1227 = vxor.u32 %v1211, 2147483648
  %v1228 = vxor.u32 %v1212, 2147483648
  %v1229 = vxor.u32 %v1213, 2147483648
  %v1230 = vxor.u32 %v1214, 2147483648
  %v1231 = vxor.u32 %v1215, 2147483648
  %v1232 = vxor.u32 %v1216, 2147483648
  %v1233 = vxor.u32 %v1217, 2147483648
  %v1234 = vxor.u32 %v1218, 2147483648
  %v1235 = vxor.u32 %v1219, 2147483648
  %v1236 = vmul.f32 %v1220, 1.442695
  %v1237 = vpow.pop %v1236
  %v1238 = vmul.f32 %v1221, 1.442695
  %v1239 = vpow.pop %v1238
  %v1240 = vmul.f32 %v1222, 1.442695
  %v1241 = vpow.pop %v1240
  %v1242 = vmul.f32 %v1223, 1.442695
  %v1243 = vpow.pop %v1242
  %v1244 = vmul.f32 %v1224, 1.442695
  %v1245 = vpow.pop %v1244
  %v1246 = vmul.f32 %v1225, 1.442695
  %v1247 = vpow.pop %v1246
  %v1248 = vmul.f32 %v1226, 1.442695
  %v1249 = vpow.pop %v1248
  %v1250 = vmul.f32 %v1227, 1.442695
  %v1251 = vpow.pop %v1250
  %v1252 = vmul.f32 %v1228, 1.442695
  %v1253 = vpow.pop %v1252
  %v1254 = vmul.f32 %v1229, 1.442695
  %v1255 = vpow.pop %v1254
  %v1256 = vmul.f32 %v1230, 1.442695
  %v1257 = vpow.pop %v1256
  %v1258 = vmul.f32 %v1231, 1.442695
  %v1259 = vpow.pop %v1258
  %v1260 = vmul.f32 %v1232, 1.442695
  %v1261 = vpow.pop %v1260
  %v1262 = vmul.f32 %v1233, 1.442695
  %v1263 = vpow.pop %v1262
  %v1264 = vmul.f32 %v1234, 1.442695
  %v1265 = vpow.pop %v1264
  %v1266 = vmul.f32 %v1235, 1.442695
  %v1267 = vpow.pop %v1266
  %v1268 = vadd.f32 %v1237, 1.0
  %v1269 = vadd.f32 %v1239, 1.0
  %v1270 = vadd.f32 %v1241, 1.0
  %v1271 = vadd.f32 %v1243, 1.0
  %v1272 = vadd.f32 %v1245, 1.0
  %v1273 = vadd.f32 %v1247, 1.0
  %v1274 = vadd.f32 %v1249, 1.0
  %v1275 = vadd.f32 %v1251, 1.0
  %v1276 = vadd.f32 %v1253, 1.0
  %v1277 = vadd.f32 %v1255, 1.0
  %v1278 = vadd.f32 %v1257, 1.0
  %v1279 = vadd.f32 %v1259, 1.0
  %v1280 = vadd.f32 %v1261, 1.0
  %v1281 = vadd.f32 %v1263, 1.0
  %v1282 = vadd.f32 %v1265, 1.0
  %v1283 = vadd.f32 %v1267, 1.0
  %v1284 = vrcp.pop %v1268
  %v1285 = vmul.f32 1.0, %v1284
  %v1286 = vrcp.pop %v1269
  %v1287 = vmul.f32 1.0, %v1286
  %v1288 = vrcp.pop %v1270
  %v1289 = vmul.f32 1.0, %v1288
  %v1290 = vrcp.pop %v1271
  %v1291 = vmul.f32 1.0, %v1290
  %v1292 = vrcp.pop %v1272
  %v1293 = vmul.f32 1.0, %v1292
  %v1294 = vrcp.pop %v1273
  %v1295 = vmul.f32 1.0, %v1294
  %v1296 = vrcp.pop %v1274
  %v1297 = vmul.f32 1.0, %v1296
  %v1298 = vrcp.pop %v1275
  %v1299 = vmul.f32 1.0, %v1298
  %v1300 = vrcp.pop %v1276
  %v1301 = vmul.f32 1.0, %v1300
  %v1302 = vrcp.pop %v1277
  %v1303 = vmul.f32 1.0, %v1302
  %v1304 = vrcp.pop %v1278
  %v1305 = vmul.f32 1.0, %v1304
  %v1306 = vrcp.pop %v1279
  %v1307 = vmul.f32 1.0, %v1306
  %v1308 = vrcp.pop %v1280
  %v1309 = vmul.f32 1.0, %v1308
  %v1310 = vrcp.pop %v1281
  %v1311 = vmul.f32 1.0, %v1310
  %v1312 = vrcp.pop %v1282
  %v1313 = vmul.f32 1.0, %v1312
  %v1314 = vrcp.pop %v1283
  %v1315 = vmul.f32 1.0, %v1314
  %v1316 = vmul.f32 %v1173, %v1030
  %v1317 = vmul.f32 %v1175, %v1033
  %v1318 = vmul.f32 %v1177, %v1038
  %v1319 = vmul.f32 %v1179, %v1041
  %v1320 = vmul.f32 %v1181, %v1046
  %v1321 = vmul.f32 %v1183, %v1049
  %v1322 = vmul.f32 %v1185, %v1054
  %v1323 = vmul.f32 %v1187, %v1057
  %v1324 = vmul.f32 %v1189, %v1062
  %v1325 = vmul.f32 %v1191, %v1065
  %v1326 = vmul.f32 %v1193, %v1070
  %v1327 = vmul.f32 %v1195, %v1073
  %v1328 = vmul.f32 %v1197, %v1078
  %v1329 = vmul.f32 %v1199, %v1081
  %v1330 = vmul.f32 %v1201, %v1086
  %v1331 = vmul.f32 %v1203, %v1089
  %v1332 = vadd.f32 %v635, %v1316
  %v1333 = vadd.f32 %v638, %v1317
  %v1334 = vadd.f32 %v643, %v1318
  %v1335 = vadd.f32 %v646, %v1319
  %v1336 = vadd.f32 %v651, %v1320
  %v1337 = vadd.f32 %v654, %v1321
  %v1338 = vadd.f32 %v659, %v1322
  %v1339 = vadd.f32 %v662, %v1323
  %v1340 = vadd.f32 %v667, %v1324
  %v1341 = vadd.f32 %v670, %v1325
  %v1342 = vadd.f32 %v675, %v1326
  %v1343 = vadd.f32 %v678, %v1327
  %v1344 = vadd.f32 %v683, %v1328
  %v1345 = vadd.f32 %v686, %v1329
  %v1346 = vadd.f32 %v691, %v1330
  %v1347 = vadd.f32 %v694, %v1331
  %v1348 = vtanh.pop %v1332
  %v1349 = vtanh.pop %v1333
  %v1350 = vtanh.pop %v1334
  %v1351 = vtanh.pop %v1335
  %v1352 = vtanh.pop %v1336
  %v1353 = vtanh.pop %v1337
  %v1354 = vtanh.pop %v1338
  %v1355 = vtanh.pop %v1339
  %v1356 = vtanh.pop %v1340
  %v1357 = vtanh.pop %v1341
  %v1358 = vtanh.pop %v1342
  %v1359 = vtanh.pop %v1343
  %v1360 = vtanh.pop %v1344
  %v1361 = vtanh.pop %v1345
  %v1362 = vtanh.pop %v1346
  %v1363 = vtanh.pop %v1347
  %v1364 = vsub.f32 1.0, %v1285
  %v1365 = vsub.f32 1.0, %v1287
  %v1366 = vsub.f32 1.0, %v1289
  %v1367 = vsub.f32 1.0, %v1291
  %v1368 = vsub.f32 1.0, %v1293
  %v1369 = vsub.f32 1.0, %v1295
  %v1370 = vsub.f32 1.0, %v1297
  %v1371 = vsub.f32 1.0, %v1299
  %v1372 = vsub.f32 1.0, %v1301
  %v1373 = vsub.f32 1.0, %v1303
  %v1374 = vsub.f32 1.0, %v1305
  %v1375 = vsub.f32 1.0, %v1307
  %v1376 = vsub.f32 1.0, %v1309
  %v1377 = vsub.f32 1.0, %v1311
  %v1378 = vsub.f32 1.0, %v1313
  %v1379 = vsub.f32 1.0, %v1315
  %v1380 = vmul.f32 %v1364, %v1348
  %v1381 = vmul.f32 %v1365, %v1349
  %v1382 = vmul.f32 %v1366, %v1350
  %v1383 = vmul.f32 %v1367, %v1351
  %v1384 = vmul.f32 %v1368, %v1352
  %v1385 = vmul.f32 %v1369, %v1353
  %v1386 = vmul.f32 %v1370, %v1354
  %v1387 = vmul.f32 %v1371, %v1355
  %v1388 = vmul.f32 %v1372, %v1356
  %v1389 = vmul.f32 %v1373, %v1357
  %v1390 = vmul.f32 %v1374, %v1358
  %v1391 = vmul.f32 %v1375, %v1359
  %v1392 = vmul.f32 %v1376, %v1360
  %v1393 = vmul.f32 %v1377, %v1361
  %v1394 = vmul.f32 %v1378, %v1362
  %v1395 = vmul.f32 %v1379, %v1363
  %v1396 = vmul.f32 %v1285, %v54
  %v1397 = vmul.f32 %v1287, %v55
  %v1398 = vmul.f32 %v1289, %v56
  %v1399 = vmul.f32 %v1291, %v57
  %v1400 = vmul.f32 %v1293, %v58
  %v1401 = vmul.f32 %v1295, %v59
  %v1402 = vmul.f32 %v1297, %v60
  %v1403 = vmul.f32 %v1299, %v61
  %v1404 = vmul.f32 %v1301, %v62
  %v1405 = vmul.f32 %v1303, %v63
  %v1406 = vmul.f32 %v1305, %v64
  %v1407 = vmul.f32 %v1307, %v65
  %v1408 = vmul.f32 %v1309, %v66
  %v1409 = vmul.f32 %v1311, %v67
  %v1410 = vmul.f32 %v1313, %v68
  %v1411 = vmul.f32 %v1315, %v69
  %v1412 = vadd.f32 %v1380, %v1396
  %v1413 = vadd.f32 %v1381, %v1397
  %v1414 = vadd.f32 %v1382, %v1398
  %v1415 = vadd.f32 %v1383, %v1399
  %v1416 = vadd.f32 %v1384, %v1400
  %v1417 = vadd.f32 %v1385, %v1401
  %v1418 = vadd.f32 %v1386, %v1402
  %v1419 = vadd.f32 %v1387, %v1403
  %v1420 = vadd.f32 %v1388, %v1404
  %v1421 = vadd.f32 %v1389, %v1405
  %v1422 = vadd.f32 %v1390, %v1406
  %v1423 = vadd.f32 %v1391, %v1407
  %v1424 = vadd.f32 %v1392, %v1408
  %v1425 = vadd.f32 %v1393, %v1409
  %v1426 = vadd.f32 %v1394, %v1410
  %v1427 = vadd.f32 %v1395, %v1411
  %s1428 = smul.u32 0, 128
  %v1429 = vlaneseq
  %v1430 = vshrl.u32 %v1429, 7
  %v1431 = vadd.s32 %v1430, 8
  %v1432 = vadd.s32 %v1430, 16
  %v1433 = vadd.s32 %v1430, 24
  %v1434 = vadd.s32 %v1430, 32
  %v1435 = vadd.s32 %v1430, 40
  %v1436 = vadd.s32 %v1430, 48
  %v1437 = vadd.s32 %v1430, 56
  %v1438 = vadd.s32 %v1430, 64
  %v1439 = vadd.s32 %v1430, 72
  %v1440 = vadd.s32 %v1430, 80
  %v1441 = vadd.s32 %v1430, 88
  %v1442 = vadd.s32 %v1430, 96
  %v1443 = vadd.s32 %v1430, 104
  %v1444 = vadd.s32 %v1430, 112
  %v1445 = vadd.s32 %v1430, 120
  %v1446 = vstv %s1428
  %v1447 = vadd.s32 %v1446, %v1430
  %v1448 = vadd.s32 %v1446, %v1431
  %v1449 = vadd.s32 %v1446, %v1432
  %v1450 = vadd.s32 %v1446, %v1433
  %v1451 = vadd.s32 %v1446, %v1434
  %v1452 = vadd.s32 %v1446, %v1435
  %v1453 = vadd.s32 %v1446, %v1436
  %v1454 = vadd.s32 %v1446, %v1437
  %v1455 = vadd.s32 %v1446, %v1438
  %v1456 = vadd.s32 %v1446, %v1439
  %v1457 = vadd.s32 %v1446, %v1440
  %v1458 = vadd.s32 %v1446, %v1441
  %v1459 = vadd.s32 %v1446, %v1442
  %v1460 = vadd.s32 %v1446, %v1443
  %v1461 = vadd.s32 %v1446, %v1444
  %v1462 = vadd.s32 %v1446, %v1445
  %vm1463 = vcmp.lt.s32.totalorder %v1447, 32
  %vm1464 = vcmp.lt.s32.totalorder %v1448, 32
  %vm1465 = vcmp.lt.s32.totalorder %v1449, 32
  %vm1466 = vcmp.lt.s32.totalorder %v1450, 32
  %vm1467 = vcmp.lt.s32.totalorder %v1451, 32
  %vm1468 = vcmp.lt.s32.totalorder %v1452, 32
  %vm1469 = vcmp.lt.s32.totalorder %v1453, 32
  %vm1470 = vcmp.lt.s32.totalorder %v1454, 32
  %vm1471 = vcmp.lt.s32.totalorder %v1455, 32
  %vm1472 = vcmp.lt.s32.totalorder %v1456, 32
  %vm1473 = vcmp.lt.s32.totalorder %v1457, 32
  %vm1474 = vcmp.lt.s32.totalorder %v1458, 32
  %vm1475 = vcmp.lt.s32.totalorder %v1459, 32
  %vm1476 = vcmp.lt.s32.totalorder %v1460, 32
  %vm1477 = vcmp.lt.s32.totalorder %v1461, 32
  %vm1478 = vcmp.lt.s32.totalorder %v1462, 32
  %v1479 = vsel %vm1463, 1, 0
  %v1480 = vsel %vm1464, 1, 0
  %v1481 = vsel %vm1465, 1, 0
  %v1482 = vsel %vm1466, 1, 0
  %v1483 = vsel %vm1467, 1, 0
  %v1484 = vsel %vm1468, 1, 0
  %v1485 = vsel %vm1469, 1, 0
  %v1486 = vsel %vm1470, 1, 0
  %v1487 = vsel %vm1471, 1, 0
  %v1488 = vsel %vm1472, 1, 0
  %v1489 = vsel %vm1473, 1, 0
  %v1490 = vsel %vm1474, 1, 0
  %v1491 = vsel %vm1475, 1, 0
  %v1492 = vsel %vm1476, 1, 0
  %v1493 = vsel %vm1477, 1, 0
  %v1494 = vsel %vm1478, 1, 0
  %vm1495 = vcmp.eq.s32.totalorder %v1479, 1
  %vm1496 = vcmp.eq.s32.totalorder %v1480, 1
  %vm1497 = vcmp.eq.s32.totalorder %v1481, 1
  %vm1498 = vcmp.eq.s32.totalorder %v1482, 1
  %vm1499 = vcmp.eq.s32.totalorder %v1483, 1
  %vm1500 = vcmp.eq.s32.totalorder %v1484, 1
  %vm1501 = vcmp.eq.s32.totalorder %v1485, 1
  %vm1502 = vcmp.eq.s32.totalorder %v1486, 1
  %vm1503 = vcmp.eq.s32.totalorder %v1487, 1
  %vm1504 = vcmp.eq.s32.totalorder %v1488, 1
  %vm1505 = vcmp.eq.s32.totalorder %v1489, 1
  %vm1506 = vcmp.eq.s32.totalorder %v1490, 1
  %vm1507 = vcmp.eq.s32.totalorder %v1491, 1
  %vm1508 = vcmp.eq.s32.totalorder %v1492, 1
  %vm1509 = vcmp.eq.s32.totalorder %v1493, 1
  %vm1510 = vcmp.eq.s32.totalorder %v1494, 1
  %v1511 = vsel %vm1495, %v1412, 0.0
  %v1512 = vsel %vm1496, %v1413, 0.0
  %v1513 = vsel %vm1497, %v1414, 0.0
  %v1514 = vsel %vm1498, %v1415, 0.0
  %v1515 = vsel %vm1499, %v1416, 0.0
  %v1516 = vsel %vm1500, %v1417, 0.0
  %v1517 = vsel %vm1501, %v1418, 0.0
  %v1518 = vsel %vm1502, %v1419, 0.0
  %v1519 = vsel %vm1503, %v1420, 0.0
  %v1520 = vsel %vm1504, %v1421, 0.0
  %v1521 = vsel %vm1505, %v1422, 0.0
  %v1522 = vsel %vm1506, %v1423, 0.0
  %v1523 = vsel %vm1507, %v1424, 0.0
  %v1524 = vsel %vm1508, %v1425, 0.0
  %v1525 = vsel %vm1509, %v1426, 0.0
  %v1526 = vsel %vm1510, %v1427, 0.0
  %v1527 = vpack.c.bf16 %v1512, %v1511
  %v1528 = vpack.c.bf16 %v1514, %v1513
  %v1529 = vpack.c.bf16 %v1516, %v1515
  %v1530 = vpack.c.bf16 %v1518, %v1517
  %v1531 = vpack.c.bf16 %v1520, %v1519
  %v1532 = vpack.c.bf16 %v1522, %v1521
  %v1533 = vpack.c.bf16 %v1524, %v1523
  %v1534 = vpack.c.bf16 %v1526, %v1525
  %v1535 = vld [vmem:[%s8] sm:$0xf]
  %v1536 = vld [vmem:[%s8 + $0x4] sm:$0xf]
  %v1537 = vld [vmem:[%s8 + $0x8] sm:$0xf]
  %v1538 = vld [vmem:[%s8 + $0xc] sm:$0xf]
  %v1539 = vld [vmem:[%s8 + $0x10] sm:$0xf]
  %v1540 = vld [vmem:[%s8 + $0x14] sm:$0xf]
  %v1541 = vld [vmem:[%s8 + $0x18] sm:$0xf]
  %v1542 = vld [vmem:[%s8 + $0x1c] sm:$0xf]
  %v1543 = vld [vmem:[%s8 + $0x20] sm:$0xf]
  %v1544 = vld [vmem:[%s8 + $0x24] sm:$0xf]
  %v1545 = vld [vmem:[%s8 + $0x28] sm:$0xf]
  %v1546 = vld [vmem:[%s8 + $0x2c] sm:$0xf]
  %v1547 = vld [vmem:[%s8 + $0x30] sm:$0xf]
  %v1548 = vld [vmem:[%s8 + $0x34] sm:$0xf]
  %v1549 = vld [vmem:[%s8 + $0x38] sm:$0xf]
  %v1550 = vld [vmem:[%s8 + $0x3c] sm:$0xf]
  %v1551 = vld [vmem:[%s9] sm:$0x1]
  %v1553 = vlaneseq
  %v1554 = vshrl.u32 %v1553, 7
  %v1555 = vsub.s32 0, %v1554
  %v1556 = vrot.slane %v1551, %v1555
  %v1574 = vunpack.c.l.b16 %v1535
  %v1575 = vunpack.c.l.b16 %v1536
  %v1576 = vunpack.c.l.b16 %v1537
  %v1577 = vunpack.c.l.b16 %v1538
  %v1578 = vunpack.c.l.b16 %v1539
  %v1579 = vunpack.c.l.b16 %v1540
  %v1580 = vunpack.c.l.b16 %v1541
  %v1581 = vunpack.c.l.b16 %v1542
  %v1582 = vunpack.c.l.b16 %v1543
  %v1583 = vunpack.c.l.b16 %v1544
  %v1584 = vunpack.c.l.b16 %v1545
  %v1585 = vunpack.c.l.b16 %v1546
  %v1586 = vunpack.c.l.b16 %v1547
  %v1587 = vunpack.c.l.b16 %v1548
  %v1588 = vunpack.c.l.b16 %v1549
  %v1589 = vunpack.c.l.b16 %v1550
  %v1590 = vpack.c.b16 %v1575, %v1574
  %v1591 = vpack.c.b16 %v1577, %v1576
  %v1592 = vpack.c.b16 %v1579, %v1578
  %v1593 = vpack.c.b16 %v1581, %v1580
  %v1594 = vpack.c.b16 %v1583, %v1582
  %v1595 = vpack.c.b16 %v1585, %v1584
  %v1596 = vpack.c.b16 %v1587, %v1586
  %v1597 = vpack.c.b16 %v1589, %v1588
  %1606 = vmatprep.subr.bf16.mxu0 0
  %1607 = vmatpush1.bf16.msra.mxu0 %v1590
  %1608 = vmatprep.subr.bf16.mxu0 0
  %1609 = vmatpush1.bf16.msra.mxu0 %v1591
  %1610 = vmatprep.subr.bf16.mxu0 0
  %1611 = vmatpush1.bf16.msra.mxu0 %v1592
  %1612 = vmatprep.subr.bf16.mxu0 0
  %1613 = vmatpush1.bf16.msra.mxu0 %v1593
  %1614 = vmatprep.subr.bf16.mxu0 0
  %1615 = vmatpush1.bf16.msra.mxu0 %v1594
  %1616 = vmatprep.subr.bf16.mxu0 0
  %1617 = vmatpush1.bf16.msra.mxu0 %v1595
  %1618 = vmatprep.subr.bf16.mxu0 0
  %1619 = vmatpush1.bf16.msra.mxu0 %v1596
  %1620 = vmatprep.subr.bf16.mxu0 0
  %1621 = vmatpush1.bf16.msra.mxu0 %v1597
  %1622 = vmatprep.subr.bf16.mxu0 0
  %1623 = vmatpush1.bf16.msra.mxu0 0
  %1624 = vmatprep.subr.bf16.mxu0 0
  %1625 = vmatpush1.bf16.msra.mxu0 0
  %1626 = vmatprep.subr.bf16.mxu0 0
  %1627 = vmatpush1.bf16.msra.mxu0 0
  %1628 = vmatprep.subr.bf16.mxu0 0
  %1629 = vmatpush1.bf16.msra.mxu0 0
  %1630 = vmatprep.subr.bf16.mxu0 0
  %1631 = vmatpush1.bf16.msra.mxu0 0
  %1632 = vmatprep.subr.bf16.mxu0 0
  %1633 = vmatpush1.bf16.msra.mxu0 0
  %1634 = vmatprep.subr.bf16.mxu0 0
  %1635 = vmatpush1.bf16.msra.mxu0 0
  %1636 = vmatprep.subr.bf16.mxu0 0
  %1637 = vmatpush1.bf16.msra.mxu0 0
  %1638 = vmatprep.mubr.bf16.mxu0 0
  %1639 = vmatmul.mubr.bf16.gmra.mrb[0].mxu0 %v1527
  %v1640 = vpop.f32.mrb[0].mxu0
  %v1641 = vadd.f32 %v1556, %v1640
  %v1642 = vpop.f32.mrb[0].mxu0
  %v1643 = vpop.f32.mrb[0].mxu0
  %v1644 = vadd.f32 %v1556, %v1643
  %v1645 = vpop.f32.mrb[0].mxu0
  %1646 = vmatprep.mubr.bf16.mxu0 0
  %1647 = vmatmul.mubr.bf16.gmra.mrb[0].mxu0 %v1528
  %v1648 = vpop.f32.mrb[0].mxu0
  %v1649 = vadd.f32 %v1556, %v1648
  %v1650 = vpop.f32.mrb[0].mxu0
  %v1651 = vpop.f32.mrb[0].mxu0
  %v1652 = vadd.f32 %v1556, %v1651
  %v1653 = vpop.f32.mrb[0].mxu0
  %1654 = vmatprep.mubr.bf16.mxu0 0
  %1655 = vmatmul.mubr.bf16.gmra.mrb[0].mxu0 %v1529
  %v1656 = vpop.f32.mrb[0].mxu0
  %v1657 = vadd.f32 %v1556, %v1656
  %v1658 = vpop.f32.mrb[0].mxu0
  %v1659 = vpop.f32.mrb[0].mxu0
  %v1660 = vadd.f32 %v1556, %v1659
  %v1661 = vpop.f32.mrb[0].mxu0
  %1662 = vmatprep.mubr.bf16.mxu0 0
  %1663 = vmatmul.mubr.bf16.gmra.mrb[0].mxu0 %v1530
  %v1664 = vpop.f32.mrb[0].mxu0
  %v1665 = vadd.f32 %v1556, %v1664
  %v1666 = vpop.f32.mrb[0].mxu0
  %v1667 = vpop.f32.mrb[0].mxu0
  %v1668 = vadd.f32 %v1556, %v1667
  %v1669 = vpop.f32.mrb[0].mxu0
  %1670 = vmatprep.mubr.bf16.mxu0 0
  %1671 = vmatmul.mubr.bf16.gmra.mrb[0].mxu0 %v1531
  %v1672 = vpop.f32.mrb[0].mxu0
  %v1673 = vadd.f32 %v1556, %v1672
  %v1674 = vpop.f32.mrb[0].mxu0
  %v1675 = vpop.f32.mrb[0].mxu0
  %v1676 = vadd.f32 %v1556, %v1675
  %v1677 = vpop.f32.mrb[0].mxu0
  %1678 = vmatprep.mubr.bf16.mxu0 0
  %1679 = vmatmul.mubr.bf16.gmra.mrb[0].mxu0 %v1532
  %v1680 = vpop.f32.mrb[0].mxu0
  %v1681 = vadd.f32 %v1556, %v1680
  %v1682 = vpop.f32.mrb[0].mxu0
  %v1683 = vpop.f32.mrb[0].mxu0
  %v1684 = vadd.f32 %v1556, %v1683
  %v1685 = vpop.f32.mrb[0].mxu0
  %1686 = vmatprep.mubr.bf16.mxu0 0
  %1687 = vmatmul.mubr.bf16.gmra.mrb[0].mxu0 %v1533
  %v1688 = vpop.f32.mrb[0].mxu0
  %v1689 = vadd.f32 %v1556, %v1688
  %v1690 = vpop.f32.mrb[0].mxu0
  %v1691 = vpop.f32.mrb[0].mxu0
  %v1692 = vadd.f32 %v1556, %v1691
  %v1693 = vpop.f32.mrb[0].mxu0
  %1694 = vmatprep.mubr.bf16.mxu0 0
  %1695 = vmatmul.mubr.bf16.gmra.mrb[0].mxu0 %v1534
  %v1696 = vpop.f32.mrb[0].mxu0
  %v1697 = vadd.f32 %v1556, %v1696
  %v1698 = vpop.f32.mrb[0].mxu0
  %v1699 = vpop.f32.mrb[0].mxu0
  %v1700 = vadd.f32 %v1556, %v1699
  %v1701 = vpop.f32.mrb[0].mxu0
  %1702 = vdwg.mxu0
  %v1703 = vsel %vm1495, %v1641, 0.0
  %v1704 = vsel %vm1496, %v1644, 0.0
  %v1705 = vsel %vm1497, %v1649, 0.0
  %v1706 = vsel %vm1498, %v1652, 0.0
  %v1707 = vsel %vm1499, %v1657, 0.0
  %v1708 = vsel %vm1500, %v1660, 0.0
  %v1709 = vsel %vm1501, %v1665, 0.0
  %v1710 = vsel %vm1502, %v1668, 0.0
  %v1711 = vsel %vm1503, %v1673, 0.0
  %v1712 = vsel %vm1504, %v1676, 0.0
  %v1713 = vsel %vm1505, %v1681, 0.0
  %v1714 = vsel %vm1506, %v1684, 0.0
  %v1715 = vsel %vm1507, %v1689, 0.0
  %v1716 = vsel %vm1508, %v1692, 0.0
  %v1717 = vsel %vm1509, %v1697, 0.0
  %v1718 = vsel %vm1510, %v1700, 0.0
  %1719 = vst [vmem:[%s10] sm:$0xff] %v1703
  %1720 = vst [vmem:[%s10 + $0x8] sm:$0xff] %v1704
  %1721 = vst [vmem:[%s10 + $0x10] sm:$0xff] %v1705
  %1722 = vst [vmem:[%s10 + $0x18] sm:$0xff] %v1706
  %1723 = vst [vmem:[%s10 + $0x20] sm:$0xff] %v1707
  %1724 = vst [vmem:[%s10 + $0x28] sm:$0xff] %v1708
  %1725 = vst [vmem:[%s10 + $0x30] sm:$0xff] %v1709
  %1726 = vst [vmem:[%s10 + $0x38] sm:$0xff] %v1710
  %1727 = vst [vmem:[%s10 + $0x40] sm:$0xff] %v1711
  %1728 = vst [vmem:[%s10 + $0x48] sm:$0xff] %v1712
  %1729 = vst [vmem:[%s10 + $0x50] sm:$0xff] %v1713
  %1730 = vst [vmem:[%s10 + $0x58] sm:$0xff] %v1714
  %1731 = vst [vmem:[%s10 + $0x60] sm:$0xff] %v1715
  %1732 = vst [vmem:[%s10 + $0x68] sm:$0xff] %v1716
  %1733 = vst [vmem:[%s10 + $0x70] sm:$0xff] %v1717
  %1734 = vst [vmem:[%s10 + $0x78] sm:$0xff] %v1718
  %1735 = vst [vmem:[%s11] sm:$0xff] %v1511
  %1736 = vst [vmem:[%s11 + $0x8] sm:$0xff] %v1512
  %1737 = vst [vmem:[%s11 + $0x10] sm:$0xff] %v1513
  %1738 = vst [vmem:[%s11 + $0x18] sm:$0xff] %v1514
  %1739 = vst [vmem:[%s11 + $0x20] sm:$0xff] %v1515
  %1740 = vst [vmem:[%s11 + $0x28] sm:$0xff] %v1516
  %1741 = vst [vmem:[%s11 + $0x30] sm:$0xff] %v1517
  %1742 = vst [vmem:[%s11 + $0x38] sm:$0xff] %v1518
  %1743 = vst [vmem:[%s11 + $0x40] sm:$0xff] %v1519
  %1744 = vst [vmem:[%s11 + $0x48] sm:$0xff] %v1520
  %1745 = vst [vmem:[%s11 + $0x50] sm:$0xff] %v1521
  %1746 = vst [vmem:[%s11 + $0x58] sm:$0xff] %v1522
  %1747 = vst [vmem:[%s11 + $0x60] sm:$0xff] %v1523
  %1748 = vst [vmem:[%s11 + $0x68] sm:$0xff] %v1524
  %1749 = vst [vmem:[%s11 + $0x70] sm:$0xff] %v1525
  %1750 = vst [vmem:[%s11 + $0x78] sm:$0xff] %v1526
  // Predicated region
  $region42: #{graphrnn_forward.3} parent=0 // pred_check
    _
  $region43: #{graphrnn_forward.3} parent=0 // pred_check_branch
    %1752 = sbr.rel (0) target = $region45
  $region44: #{graphrnn_forward.3} parent=0 // pred_region
    _
  $region45: #{graphrnn_forward.3} parent=0 // pred_fallthru
    _
  // Predicated region
  $region46: #{graphrnn_forward.3} parent=0 // pred_check
    _
  $region47: #{graphrnn_forward.3} parent=0 // pred_check_branch
    %1754 = sbr.rel (0) target = $region49
  $region48: #{graphrnn_forward.3} parent=0 // pred_region
    _
  $region49: #{graphrnn_forward.3} parent=0 // pred_fallthru
    _
  // Predicated region
  $region50: #{graphrnn_forward.3} parent=0 // pred_check
    _
  $region51: #{graphrnn_forward.3} parent=0 // pred_check_branch
    %1756 = sbr.rel (0) target = $region53
  $region52: #{graphrnn_forward.3} parent=0 // pred_region
    _
  $region53: #{graphrnn_forward.3} parent=0 // pred_fallthru
    _
  // Predicated region
  $region54: #{graphrnn_forward.3} parent=0 // pred_check
    _
  $region55: #{graphrnn_forward.3} parent=0 // pred_check_branch
    %1758 = sbr.rel (0) target = $region57
  $region56: #{graphrnn_forward.3} parent=0 // pred_region
    _
  $region57: #{graphrnn_forward.3} parent=0 // pred_fallthru
    _

</llo_original>
